<compile_context>
chip_gen: v7x
topology: tpu7x:2x2x1
jax: 0.10.0
libtpu: 0.0.40
codegen_flags: <defaults>
</compile_context>

<pallas_src>
import math
from functools import partial

import jax
import jax.numpy as jnp
from jax.experimental import pallas as pl
from jax.experimental.pallas import tpu as pltpu

_VMEM_LIMIT = 32 * 1024 * 1024   # safe on v5e/v6e (128 MiB) and v7x (64 MiB)
_NEG_INF = -1e30                 # finite mask bias (avoids exp(-inf - -inf))


# ----------------------------- tiling helpers ------------------------------

def _row_tile(n, cap=256):
    """Largest multiple-of-8 divisor of n that is <= cap (else full extent)."""
    best = n
    t = 8
    while t <= min(cap, n):
        if n % t == 0:
            best = t
        t += 8
    return best if best <= cap else n


def _lane_tile(n, cap=512):
    """Lane-dense (multiple-of-128) tile over the last dim, else full extent."""
    if n % 128 != 0:
        return n
    t = 128
    while t * 2 <= cap and n % (t * 2) == 0:
        t *= 2
    return t


# ----------------------------- kernel helpers ------------------------------

def _layer_norm(x, w, b, eps=1e-5):
    mu = jnp.mean(x, axis=-1, keepdims=True)
    var = jnp.mean(jnp.square(x - mu), axis=-1, keepdims=True)
    return (x - mu) * jax.lax.rsqrt(var + eps) * w + b


def _gelu_exact(x):
    # PyTorch F.gelu default = exact erf formulation
    return 0.5 * x * (1.0 + jax.lax.erf(x * (1.0 / math.sqrt(2.0))))


# ------------------------------ Pallas kernels ------------------------------

def _ln_matmul_kernel(x_ref, lnw_ref, lnb_ref, w_ref, b_ref, o_ref):
    """out = LayerNorm(x) @ W + b.  W is pre-transposed (in, out), bf16."""
    xn = _layer_norm(x_ref[...], lnw_ref[...], lnb_ref[...])
    y = jnp.dot(xn.astype(w_ref.dtype), w_ref[...],
                preferred_element_type=jnp.float32)
    o_ref[...] = (y + b_ref[...]).astype(o_ref.dtype)


def _attention_kernel(scale, q_ref, k_ref, v_ref, o_ref):
    """Causal softmax(Q K^T / sqrt(D)) V for one (batch, head) tile."""
    q = q_ref[...]                                   # (S, D) bf16
    k = k_ref[...]
    v = v_ref[...]
    S = q.shape[0]

    s = jax.lax.dot_general(q, k, (((1,), (1,)), ((), ())),
                            preferred_element_type=jnp.float32) * scale
    row = jax.lax.broadcasted_iota(jnp.int32, (S, S), 0)
    col = jax.lax.broadcasted_iota(jnp.int32, (S, S), 1)
    s = jnp.where(col <= row, s, _NEG_INF)

    m = jnp.max(s, axis=-1, keepdims=True)
    e = jnp.exp(s - m)
    denom = jnp.sum(e, axis=-1, keepdims=True)
    p = e * pl.reciprocal(denom, approx=True)        # EUP, not VALU divide

    ctx = jnp.dot(p.astype(v.dtype), v, preferred_element_type=jnp.float32)
    o_ref[...] = ctx.astype(o_ref.dtype)


def _proj_ffn_kernel(x_ref, ctx_ref, wout_ref, bout_ref, ln2w_ref, ln2b_ref,
                     w1_ref, b1_ref, w2_ref, b2_ref, o_ref):
    """x1 = x + out_proj(ctx); out = x1 + FFN(LN2(x1))   (row tile)."""
    x = x_ref[...]
    attn = jnp.dot(ctx_ref[...], wout_ref[...],
                   preferred_element_type=jnp.float32)
    x1 = x + attn + bout_ref[...]

    xn = _layer_norm(x1, ln2w_ref[...], ln2b_ref[...])
    h = _gelu_exact(jnp.dot(xn.astype(w1_ref.dtype), w1_ref[...],
                            preferred_element_type=jnp.float32) + b1_ref[...])
    y = jnp.dot(h.astype(w2_ref.dtype), w2_ref[...],
                preferred_element_type=jnp.float32) + b2_ref[...]
    o_ref[...] = (x1 + y).astype(o_ref.dtype)


# ----------------------------- pallas_call glue -----------------------------

def _ln_matmul_call(x, lnw, lnb, w, b, *, tm, tn, out_dtype):
    BS, E = x.shape
    N = w.shape[1]
    return pl.pallas_call(
        _ln_matmul_kernel,
        out_shape=jax.ShapeDtypeStruct((BS, N), out_dtype),
        grid=(BS // tm, N // tn),
        in_specs=[
            pl.BlockSpec((tm, E), lambda i, j: (i, 0)),    # x row tile
            pl.BlockSpec((1, E), lambda i, j: (0, 0)),     # ln weight
            pl.BlockSpec((1, E), lambda i, j: (0, 0)),     # ln bias
            pl.BlockSpec((E, tn), lambda i, j: (0, j)),    # W column tile
            pl.BlockSpec((1, tn), lambda i, j: (0, j)),    # bias column tile
        ],
        out_specs=pl.BlockSpec((tm, tn), lambda i, j: (i, j)),
        compiler_params=pltpu.CompilerParams(
            dimension_semantics=("parallel", "parallel"),
            vmem_limit_bytes=_VMEM_LIMIT),
    )(x, lnw, lnb, w, b)


def _attention_call(q, k, v, *, scale):
    B, H, S, D = q.shape
    spec = pl.BlockSpec((None, None, S, D), lambda b, h: (b, h, 0, 0))
    return pl.pallas_call(
        partial(_attention_kernel, scale),
        out_shape=jax.ShapeDtypeStruct((B, H, S, D), jnp.bfloat16),
        grid=(B, H),
        in_specs=[spec, spec, spec],
        out_specs=spec,
        compiler_params=pltpu.CompilerParams(
            dimension_semantics=("parallel", "parallel"),
            vmem_limit_bytes=_VMEM_LIMIT),
    )(q, k, v)


def _proj_ffn_call(x, ctx, lp, *, tm):
    BS, E = x.shape
    ffdim = lp['w1'].shape[1]
    row = lambda i: (i, 0)
    rep = lambda i: (0, 0)
    return pl.pallas_call(
        _proj_ffn_kernel,
        out_shape=jax.ShapeDtypeStruct((BS, E), jnp.float32),
        grid=(BS // tm,),
        in_specs=[
            pl.BlockSpec((tm, E), row),        # x (residual stream)
            pl.BlockSpec((tm, E), row),        # attention context
            pl.BlockSpec((E, E), rep),         # out_proj W
            pl.BlockSpec((1, E), rep),         # out_proj b
            pl.BlockSpec((1, E), rep),         # ln2 w
            pl.BlockSpec((1, E), rep),         # ln2 b
            pl.BlockSpec((E, ffdim), rep),     # ff1 W
            pl.BlockSpec((1, ffdim), rep),     # ff1 b
            pl.BlockSpec((ffdim, E), rep),     # ff2 W
            pl.BlockSpec((1, E), rep),         # ff2 b
        ],
        out_specs=pl.BlockSpec((tm, E), row),
        input_output_aliases={0: 0},           # reuse residual-stream buffer
        compiler_params=pltpu.CompilerParams(
            dimension_semantics=("parallel",),
            vmem_limit_bytes=_VMEM_LIMIT),
    )(x, ctx, lp['wout'], lp['bout'], lp['ln2_w'], lp['ln2_b'],
      lp['w1'], lp['b1'], lp['w2'], lp['b2'])


def transformer_lm_forward(src, params, *, embed_dim, nhead):
    B, S = src.shape
    E, H = embed_dim, nhead
    D = E // H
    BS = B * S
    scale = 1.0 / math.sqrt(D)

    # --- embedding gather + positional encoding (XLA glue) ---
    x = jnp.take(params['tok_emb'], src, axis=0) * math.sqrt(E)
    x = x + params['pos'][None, :S, :]
    x = x.reshape(BS, E).astype(jnp.float32)

    tm = _row_tile(BS)

    for lp in params['layers']:
        # fused LN1 + QKV projection: one (rows, E) @ (E, 3E) matmul
        qkv = _ln_matmul_call(x, lp['ln1_w'], lp['ln1_b'], lp['wqkv'],
                              lp['bqkv'], tm=tm, tn=_lane_tile(3 * E),
                              out_dtype=jnp.bfloat16)
        # head split: wrapper-side layout plumbing (free for the kernels)
        qkv = qkv.reshape(B, S, 3, H, D)
        q = jnp.transpose(qkv[:, :, 0], (0, 2, 1, 3))   # (B, H, S, D)
        k = jnp.transpose(qkv[:, :, 1], (0, 2, 1, 3))
        v = jnp.transpose(qkv[:, :, 2], (0, 2, 1, 3))

        # per-(batch, head) causal attention on (S, S) tiles
        ctx = _attention_call(q, k, v, scale=scale)
        ctx = jnp.transpose(ctx, (0, 2, 1, 3)).reshape(BS, E)

        # fused out_proj + residual + LN2 + GELU FFN + residual
        x = _proj_ffn_call(x, ctx, lp, tm=tm)

    # final LayerNorm + lm_head, tiled lane-dense over the vocab dim
    V = params['lm_w_t'].shape[1]
    logits = _ln_matmul_call(x, params['lnf_w'], params['lnf_b'],
                             params['lm_w_t'], params['lm_b'],
                             tm=tm, tn=_lane_tile(V), out_dtype=jnp.float32)
    return logits.reshape(B, S, V)


# ------------------------- deterministic parameters --------------------------

def init_params(key, vocab_size, embed_dim, nhead, num_layers, dim_ff, max_seq_len):
    """PyTorch-convention parameters (weights are (out_features, in_features))."""
    E, F = embed_dim, dim_ff
    ks = iter(jax.random.split(key, 4 * num_layers + 4))
    params = {
        'tok_emb': jax.random.uniform(next(ks), (vocab_size, E), jnp.float32, -0.02, 0.02),
        'pos': 0.02 * jax.random.normal(next(ks), (max_seq_len, E), jnp.float32),
        'lnf_w': jnp.ones((1, E), jnp.float32),
        'lnf_b': jnp.zeros((1, E), jnp.float32),
        'lm_w': jax.random.uniform(next(ks), (vocab_size, E), jnp.float32, -0.02, 0.02),
        'lm_b': jnp.zeros((1, vocab_size), jnp.float32),
        'layers': [],
    }
    for _ in range(num_layers):
        params['layers'].append({
            'ln1_w': jnp.ones((1, E), jnp.float32),
            'ln1_b': jnp.zeros((1, E), jnp.float32),
            'in_w': 0.05 * jax.random.normal(next(ks), (3 * E, E), jnp.float32),
            'in_b': jnp.zeros((1, 3 * E), jnp.float32),
            'out_w': 0.05 * jax.random.normal(next(ks), (E, E), jnp.float32),
            'out_b': jnp.zeros((1, E), jnp.float32),
            'ln2_w': jnp.ones((1, E), jnp.float32),
            'ln2_b': jnp.zeros((1, E), jnp.float32),
            'ff1_w': 0.05 * jax.random.normal(next(ks), (F, E), jnp.float32),
            'ff1_b': jnp.zeros((1, F), jnp.float32),
            'ff2_w': 0.05 * jax.random.normal(next(ks), (E, F), jnp.float32),
            'ff2_b': jnp.zeros((1, E), jnp.float32),
        })
    return params


def prepare_params(raw):
    """HBM-side prep: transpose weights to (in, out) and cast matmul operands
    to bf16 (keeps LN params / biases in f32)."""
    def prep_layer(lp):
        return {
            'ln1_w': lp['ln1_w'], 'ln1_b': lp['ln1_b'],
            'wqkv': jnp.asarray(lp['in_w'].T, jnp.bfloat16),   # (E, 3E)
            'bqkv': lp['in_b'],
            'wout': jnp.asarray(lp['out_w'].T, jnp.bfloat16),  # (E, E)
            'bout': lp['out_b'],
            'ln2_w': lp['ln2_w'], 'ln2_b': lp['ln2_b'],
            'w1': jnp.asarray(lp['ff1_w'].T, jnp.bfloat16),    # (E, F)
            'b1': lp['ff1_b'],
            'w2': jnp.asarray(lp['ff2_w'].T, jnp.bfloat16),    # (F, E)
            'b2': lp['ff2_b'],
        }
    return {
        'tok_emb': raw['tok_emb'],
        'pos': raw['pos'],
        'lnf_w': raw['lnf_w'], 'lnf_b': raw['lnf_b'],
        'lm_w_t': jnp.asarray(raw['lm_w'].T, jnp.bfloat16),    # (E, V)
        'lm_b': raw['lm_b'],
        'layers': [prep_layer(lp) for lp in raw['layers']],
    }


# ------------------------------ pure-JAX reference ---------------------------

def reference_forward(src, params, *, embed_dim, nhead):
    B, S = src.shape
    E, H = embed_dim, nhead
    D = E // H
    x = jnp.take(params['tok_emb'], src, axis=0) * math.sqrt(E) + params['pos'][None, :S, :]
    causal = jnp.where(jnp.tril(jnp.ones((S, S), bool)), 0.0, -jnp.inf)

    def ln(x, w, b):
        mu = x.mean(-1, keepdims=True)
        var = ((x - mu) ** 2).mean(-1, keepdims=True)
        return (x - mu) / jnp.sqrt(var + 1e-5) * w[0] + b[0]

    for lp in params['layers']:
        xn = ln(x, lp['ln1_w'], lp['ln1_b'])
        qkv = jnp.einsum('bse,fe->bsf', xn, lp['in_w']) + lp['in_b'][0]
        q, k, v = jnp.split(qkv, 3, axis=-1)
        q = q.reshape(B, S, H, D); k = k.reshape(B, S, H, D); v = v.reshape(B, S, H, D)
        s = jnp.einsum('bqhd,bkhd->bhqk', q, k) / math.sqrt(D) + causal
        p = jax.nn.softmax(s, axis=-1)
        o = jnp.einsum('bhqk,bkhd->bqhd', p, v).reshape(B, S, E)
        x = x + jnp.einsum('bse,fe->bsf', o, lp['out_w']) + lp['out_b'][0]
        xn2 = ln(x, lp['ln2_w'], lp['ln2_b'])
        h1 = jax.nn.gelu(jnp.einsum('bse,fe->bsf', xn2, lp['ff1_w']) + lp['ff1_b'][0],
                         approximate=False)
        x = x + jnp.einsum('bsf,ef->bse', h1, lp['ff2_w']) + lp['ff2_b'][0]
    xn = ln(x, params['lnf_w'], params['lnf_b'])
    return jnp.einsum('bse,ve->bsv', xn, params['lm_w']) + params['lm_b'][0]


# ------------------------------------ main -----------------------------------

if __name__ == "__main__":
    # small config: vocab=64, embed_dim=32, nhead=4, layers=2, ffn=64, max_seq=16
    VOCAB, E, H, L, FF, MAX_SEQ = 64, 32, 4, 2, 64, 16
    B, S = 2, 8

    key = jax.random.PRNGKey(0)
    pkey, dkey = jax.random.split(key)
    raw_params = init_params(pkey, VOCAB, E, H, L, FF, MAX_SEQ)
    params = prepare_params(raw_params)
    src = jax.random.randint(dkey, (B, S), 0, VOCAB, dtype=jnp.int32)

    fwd = jax.jit(partial(transformer_lm_forward, embed_dim=E, nhead=H))
    logits = jax.block_until_ready(fwd(src, params))

    ref = reference_forward(src, raw_params, embed_dim=E, nhead=H)
    assert logits.shape == (B, S, VOCAB)
    # bf16 matmul operands + approx reciprocal => compare with a loose bound
    err = float(jnp.max(jnp.abs(logits - ref)))
    assert err < 2e-2, err

    print("KERNEL_OK")
</pallas_src>

<mosaic_0001>
module attributes {stable_mosaic.version = 11 : i64} {
  func.func @_ln_matmul_kernel(%arg0: i32, %arg1: i32, %arg2: memref<16x32xf32, #tpu.memory_space<vmem>>, %arg3: memref<1x32xf32, #tpu.memory_space<vmem>>, %arg4: memref<1x32xf32, #tpu.memory_space<vmem>>, %arg5: memref<32x96xbf16, #tpu.memory_space<vmem>>, %arg6: memref<1x96xf32, #tpu.memory_space<vmem>>, %arg7: memref<16x96xbf16, #tpu.memory_space<vmem>>) attributes {dimension_semantics = [#tpu.dimension_semantics<parallel>, #tpu.dimension_semantics<parallel>], iteration_bounds = array<i64: 1, 1>, scalar_prefetch = 0 : i64, scratch_operands = 0 : i64, tpu.core_type = #tpu.core_type<tc>, window_params = [{transform_indices = @transform_0, window_bounds = array<i64: 16, 32>}, {pipeline_mode = #tpu.pipeline_mode<synchronous>, transform_indices = @transform_1, window_bounds = array<i64: 1, 32>}, {pipeline_mode = #tpu.pipeline_mode<synchronous>, transform_indices = @transform_2, window_bounds = array<i64: 1, 32>}, {transform_indices = @transform_3, window_bounds = array<i64: 32, 96>}, {transform_indices = @transform_4, window_bounds = array<i64: 1, 96>}, {transform_indices = @transform_5, window_bounds = array<i64: 16, 96>}]} {
    %c0 = arith.constant 0 : index
    %c0_0 = arith.constant 0 : index
    %0 = vector.load %arg2[%c0, %c0_0] : memref<16x32xf32, #tpu.memory_space<vmem>>, vector<16x32xf32>
    %c0_1 = arith.constant 0 : index
    %c0_2 = arith.constant 0 : index
    %1 = vector.load %arg3[%c0_1, %c0_2] : memref<1x32xf32, #tpu.memory_space<vmem>>, vector<1x32xf32>
    %c0_3 = arith.constant 0 : index
    %c0_4 = arith.constant 0 : index
    %2 = vector.load %arg4[%c0_3, %c0_4] : memref<1x32xf32, #tpu.memory_space<vmem>>, vector<1x32xf32>
    %cst = arith.constant dense<0.000000e+00> : vector<16xf32>
    %3 = vector.multi_reduction <add>, %0, %cst [1] : vector<16x32xf32> to vector<16xf32>
    %4 = vector.shape_cast %3 : vector<16xf32> to vector<16x1xf32>
    %cst_5 = arith.constant 3.200000e+01 : f32
    %5 = vector.broadcast %cst_5 : f32 to vector<16x1xf32>
    %6 = arith.divf %4, %5 : vector<16x1xf32>
    %7 = vector.broadcast %6 : vector<16x1xf32> to vector<16x32xf32>
    %8 = arith.subf %0, %7 : vector<16x32xf32>
    %9 = arith.mulf %8, %8 : vector<16x32xf32>
    %cst_6 = arith.constant dense<0.000000e+00> : vector<16xf32>
    %10 = vector.multi_reduction <add>, %9, %cst_6 [1] : vector<16x32xf32> to vector<16xf32>
    %11 = vector.shape_cast %10 : vector<16xf32> to vector<16x1xf32>
    %cst_7 = arith.constant 3.200000e+01 : f32
    %12 = vector.broadcast %cst_7 : f32 to vector<16x1xf32>
    %13 = arith.divf %11, %12 : vector<16x1xf32>
    %14 = vector.broadcast %6 : vector<16x1xf32> to vector<16x32xf32>
    %15 = arith.subf %0, %14 : vector<16x32xf32>
    %cst_8 = arith.constant 9.99999974E-6 : f32
    %16 = vector.broadcast %cst_8 : f32 to vector<16x1xf32>
    %17 = arith.addf %13, %16 : vector<16x1xf32>
    %18 = math.rsqrt %17 : vector<16x1xf32>
    %19 = vector.broadcast %18 : vector<16x1xf32> to vector<16x32xf32>
    %20 = arith.mulf %15, %19 : vector<16x32xf32>
    %21 = vector.broadcast %1 : vector<1x32xf32> to vector<16x32xf32>
    %22 = arith.mulf %20, %21 : vector<16x32xf32>
    %23 = vector.broadcast %2 : vector<1x32xf32> to vector<16x32xf32>
    %24 = arith.addf %22, %23 : vector<16x32xf32>
    %25 = arith.truncf %24 : vector<16x32xf32> to vector<16x32xbf16>
    %c0_9 = arith.constant 0 : index
    %c0_10 = arith.constant 0 : index
    %26 = vector.load %arg5[%c0_9, %c0_10] : memref<32x96xbf16, #tpu.memory_space<vmem>>, vector<32x96xbf16>
    %cst_11 = arith.constant dense<0.000000e+00> : vector<16x96xf32>
    %27 = tpu.matmul %25, %26, %cst_11 {dimension_numbers = #tpu.dot_dimension_numbers<[1], [0], [0], [1], [0, 0, 1, 1], [], []>} : vector<16x32xbf16>, vector<32x96xbf16>, vector<16x96xf32> -> vector<16x96xf32>
    %c0_12 = arith.constant 0 : index
    %c0_13 = arith.constant 0 : index
    %28 = vector.load %arg6[%c0_12, %c0_13] : memref<1x96xf32, #tpu.memory_space<vmem>>, vector<1x96xf32>
    %29 = vector.broadcast %28 : vector<1x96xf32> to vector<16x96xf32>
    %30 = arith.addf %27, %29 : vector<16x96xf32>
    %31 = arith.truncf %30 : vector<16x96xf32> to vector<16x96xbf16>
    %c0_14 = arith.constant 0 : index
    %c0_15 = arith.constant 0 : index
    %32 = vector.load %arg7[%c0_14, %c0_15] : memref<16x96xbf16, #tpu.memory_space<vmem>>, vector<16x96xbf16>
    tpu.vector_store %arg7[%c0_14, %c0_15], %31 {strides = array<i32>} : memref<16x96xbf16, #tpu.memory_space<vmem>>, vector<16x96xbf16>,
    return
  }
  func.func @transform_0(%arg0: i32, %arg1: i32) -> (i32, i32) {
    %c0_i32 = arith.constant 0 : i32
    %c0_i32_0 = arith.constant 0 : i32
    return %arg0, %c0_i32 : i32, i32
  }
  func.func @transform_1(%arg0: i32, %arg1: i32) -> (i32, i32) {
    %c0_i32 = arith.constant 0 : i32
    %c0_i32_0 = arith.constant 0 : i32
    %c0_i32_1 = arith.constant 0 : i32
    return %c0_i32, %c0_i32_0 : i32, i32
  }
  func.func @transform_2(%arg0: i32, %arg1: i32) -> (i32, i32) {
    %c0_i32 = arith.constant 0 : i32
    %c0_i32_0 = arith.constant 0 : i32
    %c0_i32_1 = arith.constant 0 : i32
    return %c0_i32, %c0_i32_0 : i32, i32
  }
  func.func @transform_3(%arg0: i32, %arg1: i32) -> (i32, i32) {
    %c0_i32 = arith.constant 0 : i32
    %c0_i32_0 = arith.constant 0 : i32
    return %c0_i32, %arg1 : i32, i32
  }
  func.func @transform_4(%arg0: i32, %arg1: i32) -> (i32, i32) {
    %c0_i32 = arith.constant 0 : i32
    %c0_i32_0 = arith.constant 0 : i32
    return %c0_i32, %arg1 : i32, i32
  }
  func.func @transform_5(%arg0: i32, %arg1: i32) -> (i32, i32) {
    %c0_i32 = arith.constant 0 : i32
    return %arg0, %arg1 : i32, i32
  }
}

module attributes {stable_mosaic.version = 11 : i64} {
  func.func @_attention_kernel(%arg0: i32, %arg1: i32, %arg2: memref<1x1x8x8xbf16, #tpu.memory_space<vmem>>, %arg3: memref<1x1x8x8xbf16, #tpu.memory_space<vmem>>, %arg4: memref<1x1x8x8xbf16, #tpu.memory_space<vmem>>, %arg5: memref<1x1x8x8xbf16, #tpu.memory_space<vmem>>) attributes {dimension_semantics = [#tpu.dimension_semantics<parallel>, #tpu.dimension_semantics<parallel>], iteration_bounds = array<i64: 2, 4>, scalar_prefetch = 0 : i64, scratch_operands = 0 : i64, tpu.core_type = #tpu.core_type<tc>, window_params = [{transform_indices = @transform_0, window_bounds = array<i64: 1, 1, 8, 8>}, {transform_indices = @transform_1, window_bounds = array<i64: 1, 1, 8, 8>}, {transform_indices = @transform_2, window_bounds = array<i64: 1, 1, 8, 8>}, {transform_indices = @transform_3, window_bounds = array<i64: 1, 1, 8, 8>}]} {
    %c0 = arith.constant 0 : index
    %c0_0 = arith.constant 0 : index
    %c0_1 = arith.constant 0 : index
    %c0_2 = arith.constant 0 : index
    %0 = vector.load %arg2[%c0, %c0_0, %c0_1, %c0_2] : memref<1x1x8x8xbf16, #tpu.memory_space<vmem>>, vector<1x1x8x8xbf16>
    %1 = vector.shape_cast %0 : vector<1x1x8x8xbf16> to vector<8x8xbf16>
    %c0_3 = arith.constant 0 : index
    %c0_4 = arith.constant 0 : index
    %c0_5 = arith.constant 0 : index
    %c0_6 = arith.constant 0 : index
    %2 = vector.load %arg3[%c0_3, %c0_4, %c0_5, %c0_6] : memref<1x1x8x8xbf16, #tpu.memory_space<vmem>>, vector<1x1x8x8xbf16>
    %3 = vector.shape_cast %2 : vector<1x1x8x8xbf16> to vector<8x8xbf16>
    %c0_7 = arith.constant 0 : index
    %c0_8 = arith.constant 0 : index
    %c0_9 = arith.constant 0 : index
    %c0_10 = arith.constant 0 : index
    %4 = vector.load %arg4[%c0_7, %c0_8, %c0_9, %c0_10] : memref<1x1x8x8xbf16, #tpu.memory_space<vmem>>, vector<1x1x8x8xbf16>
    %5 = vector.shape_cast %4 : vector<1x1x8x8xbf16> to vector<8x8xbf16>
    %cst = arith.constant dense<0.000000e+00> : vector<8x8xf32>
    %6 = tpu.matmul %1, %3, %cst {dimension_numbers = #tpu.dot_dimension_numbers<[1], [1], [0], [0], [0, 0, 1, 0], [], []>} : vector<8x8xbf16>, vector<8x8xbf16>, vector<8x8xf32> -> vector<8x8xf32>
    %cst_11 = arith.constant 0.353553385 : f32
    %7 = vector.broadcast %cst_11 : f32 to vector<8x8xf32>
    %8 = arith.mulf %6, %7 : vector<8x8xf32>
    %9 = tpu.iota {dimensions = array<i32: 0>} : vector<8x8xi32>
    %10 = tpu.iota {dimensions = array<i32: 1>} : vector<8x8xi32>
    %11 = arith.cmpi sle, %10, %9 : vector<8x8xi32>
    %cst_12 = arith.constant -1.000000e+30 : f32
    %12 = vector.broadcast %cst_12 : f32 to vector<8x8xf32>
    %13 = arith.select %11, %8, %12 : vector<8x8xi1>, vector<8x8xf32>
    %cst_13 = arith.constant dense<0xFF800000> : vector<8xf32>
    %14 = vector.multi_reduction <maximumf>, %13, %cst_13 [1] : vector<8x8xf32> to vector<8xf32>
    %15 = vector.shape_cast %14 : vector<8xf32> to vector<8x1xf32>
    %16 = vector.broadcast %15 : vector<8x1xf32> to vector<8x8xf32>
    %17 = arith.subf %13, %16 : vector<8x8xf32>
    %18 = math.exp %17 : vector<8x8xf32>
    %cst_14 = arith.constant dense<0.000000e+00> : vector<8xf32>
    %19 = vector.multi_reduction <add>, %18, %cst_14 [1] : vector<8x8xf32> to vector<8xf32>
    %20 = vector.shape_cast %19 : vector<8xf32> to vector<8x1xf32>
    %21 = tpu.reciprocal %20 {approx = true} : vector<8x1xf32> -> vector<8x1xf32>
    %22 = vector.broadcast %21 : vector<8x1xf32> to vector<8x8xf32>
    %23 = arith.mulf %18, %22 : vector<8x8xf32>
    %24 = arith.truncf %23 : vector<8x8xf32> to vector<8x8xbf16>
    %cst_15 = arith.constant dense<0.000000e+00> : vector<8x8xf32>
    %25 = tpu.matmul %24, %5, %cst_15 {dimension_numbers = #tpu.dot_dimension_numbers<[1], [0], [0], [1], [0, 0, 1, 1], [], []>} : vector<8x8xbf16>, vector<8x8xbf16>, vector<8x8xf32> -> vector<8x8xf32>
    %26 = arith.truncf %25 : vector<8x8xf32> to vector<8x8xbf16>
    %c0_16 = arith.constant 0 : index
    %c0_17 = arith.constant 0 : index
    %c0_18 = arith.constant 0 : index
    %c0_19 = arith.constant 0 : index
    %27 = vector.load %arg5[%c0_16, %c0_17, %c0_18, %c0_19] : memref<1x1x8x8xbf16, #tpu.memory_space<vmem>>, vector<1x1x8x8xbf16>
    %28 = vector.shape_cast %27 : vector<1x1x8x8xbf16> to vector<8x8xbf16>
    %29 = vector.shape_cast %26 : vector<8x8xbf16> to vector<1x1x8x8xbf16>
    tpu.vector_store %arg5[%c0_16, %c0_17, %c0_18, %c0_19], %29 {strides = array<i32>} : memref<1x1x8x8xbf16, #tpu.memory_space<vmem>>, vector<1x1x8x8xbf16>,
    return
  }
  func.func @transform_0(%arg0: i32, %arg1: i32) -> (i32, i32, i32, i32) {
    %c0_i32 = arith.constant 0 : i32
    %c0_i32_0 = arith.constant 0 : i32
    %c0_i32_1 = arith.constant 0 : i32
    return %arg0, %arg1, %c0_i32, %c0_i32_0 : i32, i32, i32, i32
  }
  func.func @transform_1(%arg0: i32, %arg1: i32) -> (i32, i32, i32, i32) {
    %c0_i32 = arith.constant 0 : i32
    %c0_i32_0 = arith.constant 0 : i32
    %c0_i32_1 = arith.constant 0 : i32
    return %arg0, %arg1, %c0_i32, %c0_i32_0 : i32, i32, i32, i32
  }
  func.func @transform_2(%arg0: i32, %arg1: i32) -> (i32, i32, i32, i32) {
    %c0_i32 = arith.constant 0 : i32
    %c0_i32_0 = arith.constant 0 : i32
    %c0_i32_1 = arith.constant 0 : i32
    return %arg0, %arg1, %c0_i32, %c0_i32_0 : i32, i32, i32, i32
  }
  func.func @transform_3(%arg0: i32, %arg1: i32) -> (i32, i32, i32, i32) {
    %c0_i32 = arith.constant 0 : i32
    %c0_i32_0 = arith.constant 0 : i32
    %c0_i32_1 = arith.constant 0 : i32
    return %arg0, %arg1, %c0_i32, %c0_i32_0 : i32, i32, i32, i32
  }
}

module attributes {stable_mosaic.version = 11 : i64} {
  func.func @_proj_ffn_kernel(%arg0: i32, %arg1: memref<16x32xf32, #tpu.memory_space<vmem>>, %arg2: memref<16x32xbf16, #tpu.memory_space<vmem>>, %arg3: memref<32x32xbf16, #tpu.memory_space<vmem>>, %arg4: memref<1x32xf32, #tpu.memory_space<vmem>>, %arg5: memref<1x32xf32, #tpu.memory_space<vmem>>, %arg6: memref<1x32xf32, #tpu.memory_space<vmem>>, %arg7: memref<32x64xbf16, #tpu.memory_space<vmem>>, %arg8: memref<1x64xf32, #tpu.memory_space<vmem>>, %arg9: memref<64x32xbf16, #tpu.memory_space<vmem>>, %arg10: memref<1x32xf32, #tpu.memory_space<vmem>>, %arg11: memref<16x32xf32, #tpu.memory_space<vmem>>) attributes {dimension_semantics = [#tpu.dimension_semantics<parallel>], iteration_bounds = array<i64: 1>, scalar_prefetch = 0 : i64, scratch_operands = 0 : i64, tpu.core_type = #tpu.core_type<tc>, window_params = [{transform_indices = @transform_0, window_bounds = array<i64: 16, 32>}, {transform_indices = @transform_1, window_bounds = array<i64: 16, 32>}, {pipeline_mode = #tpu.pipeline_mode<synchronous>, transform_indices = @transform_2, window_bounds = array<i64: 32, 32>}, {pipeline_mode = #tpu.pipeline_mode<synchronous>, transform_indices = @transform_3, window_bounds = array<i64: 1, 32>}, {pipeline_mode = #tpu.pipeline_mode<synchronous>, transform_indices = @transform_4, window_bounds = array<i64: 1, 32>}, {pipeline_mode = #tpu.pipeline_mode<synchronous>, transform_indices = @transform_5, window_bounds = array<i64: 1, 32>}, {pipeline_mode = #tpu.pipeline_mode<synchronous>, transform_indices = @transform_6, window_bounds = array<i64: 32, 64>}, {pipeline_mode = #tpu.pipeline_mode<synchronous>, transform_indices = @transform_7, window_bounds = array<i64: 1, 64>}, {pipeline_mode = #tpu.pipeline_mode<synchronous>, transform_indices = @transform_8, window_bounds = array<i64: 64, 32>}, {pipeline_mode = #tpu.pipeline_mode<synchronous>, transform_indices = @transform_9, window_bounds = array<i64: 1, 32>}, {transform_indices = @transform_10, window_bounds = array<i64: 16, 32>}]} {
    %c0 = arith.constant 0 : index
    %c0_0 = arith.constant 0 : index
    %0 = vector.load %arg1[%c0, %c0_0] : memref<16x32xf32, #tpu.memory_space<vmem>>, vector<16x32xf32>
    %c0_1 = arith.constant 0 : index
    %c0_2 = arith.constant 0 : index
    %1 = vector.load %arg2[%c0_1, %c0_2] : memref<16x32xbf16, #tpu.memory_space<vmem>>, vector<16x32xbf16>
    %c0_3 = arith.constant 0 : index
    %c0_4 = arith.constant 0 : index
    %2 = vector.load %arg3[%c0_3, %c0_4] : memref<32x32xbf16, #tpu.memory_space<vmem>>, vector<32x32xbf16>
    %cst = arith.constant dense<0.000000e+00> : vector<16x32xf32>
    %3 = tpu.matmul %1, %2, %cst {dimension_numbers = #tpu.dot_dimension_numbers<[1], [0], [0], [1], [0, 0, 1, 1], [], []>} : vector<16x32xbf16>, vector<32x32xbf16>, vector<16x32xf32> -> vector<16x32xf32>
    %4 = arith.addf %0, %3 : vector<16x32xf32>
    %c0_5 = arith.constant 0 : index
    %c0_6 = arith.constant 0 : index
    %5 = vector.load %arg4[%c0_5, %c0_6] : memref<1x32xf32, #tpu.memory_space<vmem>>, vector<1x32xf32>
    %6 = vector.broadcast %5 : vector<1x32xf32> to vector<16x32xf32>
    %7 = arith.addf %4, %6 : vector<16x32xf32>
    %c0_7 = arith.constant 0 : index
    %c0_8 = arith.constant 0 : index
    %8 = vector.load %arg5[%c0_7, %c0_8] : memref<1x32xf32, #tpu.memory_space<vmem>>, vector<1x32xf32>
    %c0_9 = arith.constant 0 : index
    %c0_10 = arith.constant 0 : index
    %9 = vector.load %arg6[%c0_9, %c0_10] : memref<1x32xf32, #tpu.memory_space<vmem>>, vector<1x32xf32>
    %cst_11 = arith.constant dense<0.000000e+00> : vector<16xf32>
    %10 = vector.multi_reduction <add>, %7, %cst_11 [1] : vector<16x32xf32> to vector<16xf32>
    %11 = vector.shape_cast %10 : vector<16xf32> to vector<16x1xf32>
    %cst_12 = arith.constant 3.200000e+01 : f32
    %12 = vector.broadcast %cst_12 : f32 to vector<16x1xf32>
    %13 = arith.divf %11, %12 : vector<16x1xf32>
    %14 = vector.broadcast %13 : vector<16x1xf32> to vector<16x32xf32>
    %15 = arith.subf %7, %14 : vector<16x32xf32>
    %16 = arith.mulf %15, %15 : vector<16x32xf32>
    %cst_13 = arith.constant dense<0.000000e+00> : vector<16xf32>
    %17 = vector.multi_reduction <add>, %16, %cst_13 [1] : vector<16x32xf32> to vector<16xf32>
    %18 = vector.shape_cast %17 : vector<16xf32> to vector<16x1xf32>
    %cst_14 = arith.constant 3.200000e+01 : f32
    %19 = vector.broadcast %cst_14 : f32 to vector<16x1xf32>
    %20 = arith.divf %18, %19 : vector<16x1xf32>
    %21 = vector.broadcast %13 : vector<16x1xf32> to vector<16x32xf32>
    %22 = arith.subf %7, %21 : vector<16x32xf32>
    %cst_15 = arith.constant 9.99999974E-6 : f32
    %23 = vector.broadcast %cst_15 : f32 to vector<16x1xf32>
    %24 = arith.addf %20, %23 : vector<16x1xf32>
    %25 = math.rsqrt %24 : vector<16x1xf32>
    %26 = vector.broadcast %25 : vector<16x1xf32> to vector<16x32xf32>
    %27 = arith.mulf %22, %26 : vector<16x32xf32>
    %28 = vector.broadcast %8 : vector<1x32xf32> to vector<16x32xf32>
    %29 = arith.mulf %27, %28 : vector<16x32xf32>
    %30 = vector.broadcast %9 : vector<1x32xf32> to vector<16x32xf32>
    %31 = arith.addf %29, %30 : vector<16x32xf32>
    %32 = arith.truncf %31 : vector<16x32xf32> to vector<16x32xbf16>
    %c0_16 = arith.constant 0 : index
    %c0_17 = arith.constant 0 : index
    %33 = vector.load %arg7[%c0_16, %c0_17] : memref<32x64xbf16, #tpu.memory_space<vmem>>, vector<32x64xbf16>
    %cst_18 = arith.constant dense<0.000000e+00> : vector<16x64xf32>
    %34 = tpu.matmul %32, %33, %cst_18 {dimension_numbers = #tpu.dot_dimension_numbers<[1], [0], [0], [1], [0, 0, 1, 1], [], []>} : vector<16x32xbf16>, vector<32x64xbf16>, vector<16x64xf32> -> vector<16x64xf32>
    %c0_19 = arith.constant 0 : index
    %c0_20 = arith.constant 0 : index
    %35 = vector.load %arg8[%c0_19, %c0_20] : memref<1x64xf32, #tpu.memory_space<vmem>>, vector<1x64xf32>
    %36 = vector.broadcast %35 : vector<1x64xf32> to vector<16x64xf32>
    %37 = arith.addf %34, %36 : vector<16x64xf32>
    %cst_21 = arith.constant 5.000000e-01 : f32
    %38 = vector.broadcast %cst_21 : f32 to vector<16x64xf32>
    %39 = arith.mulf %38, %37 : vector<16x64xf32>
    %cst_22 = arith.constant 0.707106769 : f32
    %40 = vector.broadcast %cst_22 : f32 to vector<16x64xf32>
    %41 = arith.mulf %37, %40 : vector<16x64xf32>
    %42 = math.erf %41 : vector<16x64xf32>
    %cst_23 = arith.constant 1.000000e+00 : f32
    %43 = vector.broadcast %cst_23 : f32 to vector<16x64xf32>
    %44 = arith.addf %43, %42 : vector<16x64xf32>
    %45 = arith.mulf %39, %44 : vector<16x64xf32>
    %46 = arith.truncf %45 : vector<16x64xf32> to vector<16x64xbf16>
    %c0_24 = arith.constant 0 : index
    %c0_25 = arith.constant 0 : index
    %47 = vector.load %arg9[%c0_24, %c0_25] : memref<64x32xbf16, #tpu.memory_space<vmem>>, vector<64x32xbf16>
    %cst_26 = arith.constant dense<0.000000e+00> : vector<16x32xf32>
    %48 = tpu.matmul %46, %47, %cst_26 {dimension_numbers = #tpu.dot_dimension_numbers<[1], [0], [0], [1], [0, 0, 1, 1], [], []>} : vector<16x64xbf16>, vector<64x32xbf16>, vector<16x32xf32> -> vector<16x32xf32>
    %c0_27 = arith.constant 0 : index
    %c0_28 = arith.constant 0 : index
    %49 = vector.load %arg10[%c0_27, %c0_28] : memref<1x32xf32, #tpu.memory_space<vmem>>, vector<1x32xf32>
    %50 = vector.broadcast %49 : vector<1x32xf32> to vector<16x32xf32>
    %51 = arith.addf %48, %50 : vector<16x32xf32>
    %52 = arith.addf %7, %51 : vector<16x32xf32>
    %c0_29 = arith.constant 0 : index
    %c0_30 = arith.constant 0 : index
    %53 = vector.load %arg11[%c0_29, %c0_30] : memref<16x32xf32, #tpu.memory_space<vmem>>, vector<16x32xf32>
    tpu.vector_store %arg11[%c0_29, %c0_30], %52 {strides = array<i32>} : memref<16x32xf32, #tpu.memory_space<vmem>>, vector<16x32xf32>,
    return
  }
  func.func @transform_0(%arg0: i32) -> (i32, i32) {
    %c0_i32 = arith.constant 0 : i32
    %c0_i32_0 = arith.constant 0 : i32
    return %arg0, %c0_i32 : i32, i32
  }
  func.func @transform_1(%arg0: i32) -> (i32, i32) {
    %c0_i32 = arith.constant 0 : i32
    %c0_i32_0 = arith.constant 0 : i32
    return %arg0, %c0_i32 : i32, i32
  }
  func.func @transform_2(%arg0: i32) -> (i32, i32) {
    %c0_i32 = arith.constant 0 : i32
    %c0_i32_0 = arith.constant 0 : i32
    %c0_i32_1 = arith.constant 0 : i32
    return %c0_i32, %c0_i32_0 : i32, i32
  }
  func.func @transform_3(%arg0: i32) -> (i32, i32) {
    %c0_i32 = arith.constant 0 : i32
    %c0_i32_0 = arith.constant 0 : i32
    %c0_i32_1 = arith.constant 0 : i32
    return %c0_i32, %c0_i32_0 : i32, i32
  }
  func.func @transform_4(%arg0: i32) -> (i32, i32) {
    %c0_i32 = arith.constant 0 : i32
    %c0_i32_0 = arith.constant 0 : i32
    %c0_i32_1 = arith.constant 0 : i32
    return %c0_i32, %c0_i32_0 : i32, i32
  }
  func.func @transform_5(%arg0: i32) -> (i32, i32) {
    %c0_i32 = arith.constant 0 : i32
    %c0_i32_0 = arith.constant 0 : i32
    %c0_i32_1 = arith.constant 0 : i32
    return %c0_i32, %c0_i32_0 : i32, i32
  }
  func.func @transform_6(%arg0: i32) -> (i32, i32) {
    %c0_i32 = arith.constant 0 : i32
    %c0_i32_0 = arith.constant 0 : i32
    %c0_i32_1 = arith.constant 0 : i32
    return %c0_i32, %c0_i32_0 : i32, i32
  }
  func.func @transform_7(%arg0: i32) -> (i32, i32) {
    %c0_i32 = arith.constant 0 : i32
    %c0_i32_0 = arith.constant 0 : i32
    %c0_i32_1 = arith.constant 0 : i32
    return %c0_i32, %c0_i32_0 : i32, i32
  }
  func.func @transform_8(%arg0: i32) -> (i32, i32) {
    %c0_i32 = arith.constant 0 : i32
    %c0_i32_0 = arith.constant 0 : i32
    %c0_i32_1 = arith.constant 0 : i32
    return %c0_i32, %c0_i32_0 : i32, i32
  }
  func.func @transform_9(%arg0: i32) -> (i32, i32) {
    %c0_i32 = arith.constant 0 : i32
    %c0_i32_0 = arith.constant 0 : i32
    %c0_i32_1 = arith.constant 0 : i32
    return %c0_i32, %c0_i32_0 : i32, i32
  }
  func.func @transform_10(%arg0: i32) -> (i32, i32) {
    %c0_i32 = arith.constant 0 : i32
    %c0_i32_0 = arith.constant 0 : i32
    return %arg0, %c0_i32 : i32, i32
  }
}

module attributes {stable_mosaic.version = 11 : i64} {
  func.func @_ln_matmul_kernel(%arg0: i32, %arg1: i32, %arg2: memref<16x32xf32, #tpu.memory_space<vmem>>, %arg3: memref<1x32xf32, #tpu.memory_space<vmem>>, %arg4: memref<1x32xf32, #tpu.memory_space<vmem>>, %arg5: memref<32x64xbf16, #tpu.memory_space<vmem>>, %arg6: memref<1x64xf32, #tpu.memory_space<vmem>>, %arg7: memref<16x64xf32, #tpu.memory_space<vmem>>) attributes {dimension_semantics = [#tpu.dimension_semantics<parallel>, #tpu.dimension_semantics<parallel>], iteration_bounds = array<i64: 1, 1>, scalar_prefetch = 0 : i64, scratch_operands = 0 : i64, tpu.core_type = #tpu.core_type<tc>, window_params = [{transform_indices = @transform_0, window_bounds = array<i64: 16, 32>}, {pipeline_mode = #tpu.pipeline_mode<synchronous>, transform_indices = @transform_1, window_bounds = array<i64: 1, 32>}, {pipeline_mode = #tpu.pipeline_mode<synchronous>, transform_indices = @transform_2, window_bounds = array<i64: 1, 32>}, {transform_indices = @transform_3, window_bounds = array<i64: 32, 64>}, {transform_indices = @transform_4, window_bounds = array<i64: 1, 64>}, {transform_indices = @transform_5, window_bounds = array<i64: 16, 64>}]} {
    %c0 = arith.constant 0 : index
    %c0_0 = arith.constant 0 : index
    %0 = vector.load %arg2[%c0, %c0_0] : memref<16x32xf32, #tpu.memory_space<vmem>>, vector<16x32xf32>
    %c0_1 = arith.constant 0 : index
    %c0_2 = arith.constant 0 : index
    %1 = vector.load %arg3[%c0_1, %c0_2] : memref<1x32xf32, #tpu.memory_space<vmem>>, vector<1x32xf32>
    %c0_3 = arith.constant 0 : index
    %c0_4 = arith.constant 0 : index
    %2 = vector.load %arg4[%c0_3, %c0_4] : memref<1x32xf32, #tpu.memory_space<vmem>>, vector<1x32xf32>
    %cst = arith.constant dense<0.000000e+00> : vector<16xf32>
    %3 = vector.multi_reduction <add>, %0, %cst [1] : vector<16x32xf32> to vector<16xf32>
    %4 = vector.shape_cast %3 : vector<16xf32> to vector<16x1xf32>
    %cst_5 = arith.constant 3.200000e+01 : f32
    %5 = vector.broadcast %cst_5 : f32 to vector<16x1xf32>
    %6 = arith.divf %4, %5 : vector<16x1xf32>
    %7 = vector.broadcast %6 : vector<16x1xf32> to vector<16x32xf32>
    %8 = arith.subf %0, %7 : vector<16x32xf32>
    %9 = arith.mulf %8, %8 : vector<16x32xf32>
    %cst_6 = arith.constant dense<0.000000e+00> : vector<16xf32>
    %10 = vector.multi_reduction <add>, %9, %cst_6 [1] : vector<16x32xf32> to vector<16xf32>
    %11 = vector.shape_cast %10 : vector<16xf32> to vector<16x1xf32>
    %cst_7 = arith.constant 3.200000e+01 : f32
    %12 = vector.broadcast %cst_7 : f32 to vector<16x1xf32>
    %13 = arith.divf %11, %12 : vector<16x1xf32>
    %14 = vector.broadcast %6 : vector<16x1xf32> to vector<16x32xf32>
    %15 = arith.subf %0, %14 : vector<16x32xf32>
    %cst_8 = arith.constant 9.99999974E-6 : f32
    %16 = vector.broadcast %cst_8 : f32 to vector<16x1xf32>
    %17 = arith.addf %13, %16 : vector<16x1xf32>
    %18 = math.rsqrt %17 : vector<16x1xf32>
    %19 = vector.broadcast %18 : vector<16x1xf32> to vector<16x32xf32>
    %20 = arith.mulf %15, %19 : vector<16x32xf32>
    %21 = vector.broadcast %1 : vector<1x32xf32> to vector<16x32xf32>
    %22 = arith.mulf %20, %21 : vector<16x32xf32>
    %23 = vector.broadcast %2 : vector<1x32xf32> to vector<16x32xf32>
    %24 = arith.addf %22, %23 : vector<16x32xf32>
    %25 = arith.truncf %24 : vector<16x32xf32> to vector<16x32xbf16>
    %c0_9 = arith.constant 0 : index
    %c0_10 = arith.constant 0 : index
    %26 = vector.load %arg5[%c0_9, %c0_10] : memref<32x64xbf16, #tpu.memory_space<vmem>>, vector<32x64xbf16>
    %cst_11 = arith.constant dense<0.000000e+00> : vector<16x64xf32>
    %27 = tpu.matmul %25, %26, %cst_11 {dimension_numbers = #tpu.dot_dimension_numbers<[1], [0], [0], [1], [0, 0, 1, 1], [], []>} : vector<16x32xbf16>, vector<32x64xbf16>, vector<16x64xf32> -> vector<16x64xf32>
    %c0_12 = arith.constant 0 : index
    %c0_13 = arith.constant 0 : index
    %28 = vector.load %arg6[%c0_12, %c0_13] : memref<1x64xf32, #tpu.memory_space<vmem>>, vector<1x64xf32>
    %29 = vector.broadcast %28 : vector<1x64xf32> to vector<16x64xf32>
    %30 = arith.addf %27, %29 : vector<16x64xf32>
    %c0_14 = arith.constant 0 : index
    %c0_15 = arith.constant 0 : index
    %31 = vector.load %arg7[%c0_14, %c0_15] : memref<16x64xf32, #tpu.memory_space<vmem>>, vector<16x64xf32>
    tpu.vector_store %arg7[%c0_14, %c0_15], %30 {strides = array<i32>} : memref<16x64xf32, #tpu.memory_space<vmem>>, vector<16x64xf32>,
    return
  }
  func.func @transform_0(%arg0: i32, %arg1: i32) -> (i32, i32) {
    %c0_i32 = arith.constant 0 : i32
    %c0_i32_0 = arith.constant 0 : i32
    return %arg0, %c0_i32 : i32, i32
  }
  func.func @transform_1(%arg0: i32, %arg1: i32) -> (i32, i32) {
    %c0_i32 = arith.constant 0 : i32
    %c0_i32_0 = arith.constant 0 : i32
    %c0_i32_1 = arith.constant 0 : i32
    return %c0_i32, %c0_i32_0 : i32, i32
  }
  func.func @transform_2(%arg0: i32, %arg1: i32) -> (i32, i32) {
    %c0_i32 = arith.constant 0 : i32
    %c0_i32_0 = arith.constant 0 : i32
    %c0_i32_1 = arith.constant 0 : i32
    return %c0_i32, %c0_i32_0 : i32, i32
  }
  func.func @transform_3(%arg0: i32, %arg1: i32) -> (i32, i32) {
    %c0_i32 = arith.constant 0 : i32
    %c0_i32_0 = arith.constant 0 : i32
    return %c0_i32, %arg1 : i32, i32
  }
  func.func @transform_4(%arg0: i32, %arg1: i32) -> (i32, i32) {
    %c0_i32 = arith.constant 0 : i32
    %c0_i32_0 = arith.constant 0 : i32
    return %c0_i32, %arg1 : i32, i32
  }
  func.func @transform_5(%arg0: i32, %arg1: i32) -> (i32, i32) {
    %c0_i32 = arith.constant 0 : i32
    return %arg0, %arg1 : i32, i32
  }
}

</mosaic_0001>

<llo_original>
// kernel: transformer_lm_forward.8
$region0: #{transformer_lm_forward.8}
  #allocation0 [shape = 'u32[]', space=smem, size = 0x4, offset = 0x4, fixed_abs, tag = 'smem constant byte address 0x4 - core index']
  #allocation1 [shape = 'u32[144,128]{1,0:T(1,128)}', space=vmem, size = 0x12000, scoped, tag = 'internal scratch']
  %s0 = inlined_call_operand.vmem [shape: bf16[2,4,8,8], index: 0, kind: input, shape index: {}]
  %s1 = inlined_call_operand.vmem [shape: bf16[2,4,8,8], index: 1, kind: input, shape index: {}]
  %s2 = inlined_call_operand.vmem [shape: bf16[2,4,8,8], index: 2, kind: input, shape index: {}]
  %s3 = inlined_call_operand.vmem [shape: bf16[2,4,8,8], index: 3, kind: output, shape index: {}]
  %s4 = sld [smem:[#allocation0]]
  $region45: #{transformer_lm_forward.8} parent=0
    _
  %s6 = ssub.s32 1, %s4
  %s7 = scalar_select 0, %s6, %s4
  loop: start=0, step=1, limit=10
  $region2: #{transformer_lm_forward.8} parent=0 // loop_pre_header
    _
  $region3: #{transformer_lm_forward.8} parent=0 // loop_header
    %s9 = sphi 0, %s13
    %p10 = scmp.ge.s32.totalorder %s9, 10
    %s16 = sphi 0, %s28
    %s17 = sphi 0, %s24
    %s18 = sphi 0, %s16
    %s19 = sphi 0, %s17
    %s20 = sphi 0, %s18
    %s21 = sphi 0, %s19
    %s33 = sphi 0, %s35
    %s36 = sphi 0, %s33
    %s37 = sphi 0, %s36
    %s53 = sphi 0, %s37
    %s61 = sphi 0, %s63
    %s64 = sphi 0, %s61
    %s65 = sphi 0, %s64
    %s81 = sphi 0, %s65
    %s89 = sphi 0, %s91
    %s92 = sphi 0, %s89
    %s93 = sphi 0, %s92
    %s109 = sphi 0, %s93
    %s117 = sphi 0, %s119
    %s120 = sphi 0, %s117
    %s121 = sphi 0, %s120
    %s137 = sphi 0, %s121
  $region4: #{transformer_lm_forward.8} parent=0 // loop_header_branch
    %12 = sbr.rel (%p10) target = $region8
  $region5: #{transformer_lm_forward.8} parent=0 // loop_body
    %s14 = ssub.s32 %s9, 1
    %s15 = ssub.s32 %s9, 2
    %s22 = sadd.s32 1, %s17
    %p23 = scmp.ge.s32.totalorder %s22, 4
    %s24 = scalar_select %p23, 0, %s22
    %s25 = sadd.s32 1, %s16
    %s26 = scalar_select %p23, %s25, %s16
    %p27 = scmp.ge.s32.totalorder %s26, 2
    %s28 = scalar_select %p27, 0, %s26
    %s29 = ssub.s32 %s16, %s28
    %s30 = ssub.s32 %s17, %s24
    %s31 = sor.u32 %s29, %s30
    %p32 = scmp.eq.s32.totalorder %s31, 0
    %s34 = sadd.s32 %s33, 1
    %s35 = scalar_select %p32, %s33, %s34
    %p38 = pneg %p32
    %p39 = scmp.eq.s32.totalorder %s9, 7
    %p40 = por %p38, %p39
    %p41 = scmp.ne.s32.totalorder %s33, %s36
    %p42 = scmp.eq.s32.totalorder %s9, 0
    %p43 = por %p41, %p42
    %p44 = scmp.ne.s32.totalorder %s33, %s36
    %p45 = scmp.eq.s32.totalorder %s14, 7
    %p46 = por %p44, %p45
    %p47 = scmp.ne.s32.totalorder %s36, %s37
    %p48 = scmp.eq.s32.totalorder %s14, 0
    %p49 = por %p47, %p48
    %p50 = scmp.ne.s32.totalorder %s36, %s37
    %p51 = scmp.eq.s32.totalorder %s15, 7
    %p52 = por %p50, %p51
    %p54 = scmp.ne.s32.totalorder %s37, %s53
    %p55 = scmp.eq.s32.totalorder %s15, 0
    %p56 = por %p54, %p55
    %s57 = ssub.s32 %s16, %s28
    %s58 = ssub.s32 %s17, %s24
    %s59 = sor.u32 %s57, %s58
    %p60 = scmp.eq.s32.totalorder %s59, 0
    %s62 = sadd.s32 %s61, 1
    %s63 = scalar_select %p60, %s61, %s62
    %p66 = pneg %p60
    %p67 = scmp.eq.s32.totalorder %s9, 7
    %p68 = por %p66, %p67
    %p69 = scmp.ne.s32.totalorder %s61, %s64
    %p70 = scmp.eq.s32.totalorder %s9, 0
    %p71 = por %p69, %p70
    %p72 = scmp.ne.s32.totalorder %s61, %s64
    %p73 = scmp.eq.s32.totalorder %s14, 7
    %p74 = por %p72, %p73
    %p75 = scmp.ne.s32.totalorder %s64, %s65
    %p76 = scmp.eq.s32.totalorder %s14, 0
    %p77 = por %p75, %p76
    %p78 = scmp.ne.s32.totalorder %s64, %s65
    %p79 = scmp.eq.s32.totalorder %s15, 7
    %p80 = por %p78, %p79
    %p82 = scmp.ne.s32.totalorder %s65, %s81
    %p83 = scmp.eq.s32.totalorder %s15, 0
    %p84 = por %p82, %p83
    %s85 = ssub.s32 %s16, %s28
    %s86 = ssub.s32 %s17, %s24
    %s87 = sor.u32 %s85, %s86
    %p88 = scmp.eq.s32.totalorder %s87, 0
    %s90 = sadd.s32 %s89, 1
    %s91 = scalar_select %p88, %s89, %s90
    %p94 = pneg %p88
    %p95 = scmp.eq.s32.totalorder %s9, 7
    %p96 = por %p94, %p95
    %p97 = scmp.ne.s32.totalorder %s89, %s92
    %p98 = scmp.eq.s32.totalorder %s9, 0
    %p99 = por %p97, %p98
    %p100 = scmp.ne.s32.totalorder %s89, %s92
    %p101 = scmp.eq.s32.totalorder %s14, 7
    %p102 = por %p100, %p101
    %p103 = scmp.ne.s32.totalorder %s92, %s93
    %p104 = scmp.eq.s32.totalorder %s14, 0
    %p105 = por %p103, %p104
    %p106 = scmp.ne.s32.totalorder %s92, %s93
    %p107 = scmp.eq.s32.totalorder %s15, 7
    %p108 = por %p106, %p107
    %p110 = scmp.ne.s32.totalorder %s93, %s109
    %p111 = scmp.eq.s32.totalorder %s15, 0
    %p112 = por %p110, %p111
    %s113 = ssub.s32 %s16, %s28
    %s114 = ssub.s32 %s17, %s24
    %s115 = sor.u32 %s113, %s114
    %p116 = scmp.eq.s32.totalorder %s115, 0
    %s118 = sadd.s32 %s117, 1
    %s119 = scalar_select %p116, %s117, %s118
    %p122 = pneg %p116
    %p123 = scmp.eq.s32.totalorder %s9, 7
    %p124 = por %p122, %p123
    %p125 = scmp.ne.s32.totalorder %s117, %s120
    %p126 = scmp.eq.s32.totalorder %s9, 0
    %p127 = por %p125, %p126
    %p128 = scmp.ne.s32.totalorder %s117, %s120
    %p129 = scmp.eq.s32.totalorder %s14, 7
    %p130 = por %p128, %p129
    %p131 = scmp.ne.s32.totalorder %s120, %s121
    %p132 = scmp.eq.s32.totalorder %s14, 0
    %p133 = por %p131, %p132
    %p134 = scmp.ne.s32.totalorder %s120, %s121
    %p135 = scmp.eq.s32.totalorder %s15, 7
    %p136 = por %p134, %p135
    %p138 = scmp.ne.s32.totalorder %s121, %s137
    %p139 = scmp.eq.s32.totalorder %s15, 0
    %p140 = por %p138, %p139
    %p141 = scmp.le.s32.totalorder 1, %s9
    %p142 = scmp.lt.s32.totalorder %s9, 9
    %p143 = pnand %p141, %p142
    %p144 = pneg %p143
    // Predicated region
    $region9: #{transformer_lm_forward.8} parent=5 // pred_check
      _
    $region10: #{transformer_lm_forward.8} parent=5 // pred_check_branch
      %146 = sbr.rel (%p143) target = $region12
    $region11: #{transformer_lm_forward.8} parent=5 // pred_region
      %s147 = ssub.s32 %s9, 1
    $region12: #{transformer_lm_forward.8} parent=5 // pred_fallthru
      _
    %p148 = scmp.lt.s32.totalorder %s9, 8
    // Predicated region
    $region13: #{transformer_lm_forward.8} parent=5 // pred_check
      %p149 = pneg %p148
    $region14: #{transformer_lm_forward.8} parent=5 // pred_check_branch
      %151 = sbr.rel (%p149) target = $region16
    $region15: #{transformer_lm_forward.8} parent=5 // pred_region
      // Predicated region
      $region17: #{transformer_lm_forward.8} parent=15 // pred_check
        %p152 = pneg %p43
      $region18: #{transformer_lm_forward.8} parent=15 // pred_check_branch
        %154 = sbr.rel (%p152) target = $region20
      $region19: #{transformer_lm_forward.8} parent=15 // pred_region
        %p155 = scmp.lt.s32.totalorder %s16, 1
        %s156 = scalar_select %p155, %s16, 1
        %p157 = scmp.lt.s32.totalorder %s17, 3
        %s158 = scalar_select %p157, %s17, 3
        %s159 = smul.addr %s156, 4
        %s160 = sadd.s32 %s158, %s159
        %s161 = smul.addr %s160, 4
        %s162 = scalar_lea.vmem %s0, %s161
      $region20: #{transformer_lm_forward.8} parent=15 // pred_fallthru
        _
      // Predicated region
      $region21: #{transformer_lm_forward.8} parent=15 // pred_check
        %p163 = pneg %p71
      $region22: #{transformer_lm_forward.8} parent=15 // pred_check_branch
        %165 = sbr.rel (%p163) target = $region24
      $region23: #{transformer_lm_forward.8} parent=15 // pred_region
        %p166 = scmp.lt.s32.totalorder %s16, 1
        %s167 = scalar_select %p166, %s16, 1
        %p168 = scmp.lt.s32.totalorder %s17, 3
        %s169 = scalar_select %p168, %s17, 3
        %s170 = smul.addr %s167, 4
        %s171 = sadd.s32 %s169, %s170
        %s172 = smul.addr %s171, 4
        %s173 = scalar_lea.vmem %s1, %s172
      $region24: #{transformer_lm_forward.8} parent=15 // pred_fallthru
        _
      // Predicated region
      $region25: #{transformer_lm_forward.8} parent=15 // pred_check
        %p174 = pneg %p99
      $region26: #{transformer_lm_forward.8} parent=15 // pred_check_branch
        %176 = sbr.rel (%p174) target = $region28
      $region27: #{transformer_lm_forward.8} parent=15 // pred_region
        %p177 = scmp.lt.s32.totalorder %s16, 1
        %s178 = scalar_select %p177, %s16, 1
        %p179 = scmp.lt.s32.totalorder %s17, 3
        %s180 = scalar_select %p179, %s17, 3
        %s181 = smul.addr %s178, 4
        %s182 = sadd.s32 %s180, %s181
        %s183 = smul.addr %s182, 4
        %s184 = scalar_lea.vmem %s2, %s183
      $region28: #{transformer_lm_forward.8} parent=15 // pred_fallthru
        _
    $region16: #{transformer_lm_forward.8} parent=5 // pred_fallthru
      _
    %p185 = scmp.le.s32.totalorder 1, %s9
    %p186 = scmp.lt.s32.totalorder %s9, 9
    %p187 = pnand %p185, %p186
    %p188 = pneg %p187
    // Predicated region
    $region29: #{transformer_lm_forward.8} parent=5 // pred_check
      _
    $region30: #{transformer_lm_forward.8} parent=5 // pred_check_branch
      %190 = sbr.rel (%p187) target = $region32
    $region31: #{transformer_lm_forward.8} parent=5 // pred_region
      %s191 = ssub.s32 %s9, 1
      %p192 = scmp.lt.s32.totalorder %s18, 1
      %s193 = scalar_select %p192, %s18, 1
      %p194 = scmp.lt.s32.totalorder %s19, 3
      %s195 = scalar_select %p194, %s19, 3
      %s196 = smul.addr %s193, 4
      %s197 = sadd.s32 %s195, %s196
      %s198 = smul.addr %s197, 4
      %s199 = scalar_lea.vmem %s0, %s198
      %p200 = pneg %p49
      %p201 = pneg %p46
      %p202 = scmp.lt.s32.totalorder %s18, 1
      %s203 = scalar_select %p202, %s18, 1
      %p204 = scmp.lt.s32.totalorder %s19, 3
      %s205 = scalar_select %p204, %s19, 3
      %s206 = smul.addr %s203, 4
      %s207 = sadd.s32 %s205, %s206
      %s208 = smul.addr %s207, 4
      %s209 = scalar_lea.vmem %s1, %s208
      %p210 = pneg %p77
      %p211 = pneg %p74
      %p212 = scmp.lt.s32.totalorder %s18, 1
      %s213 = scalar_select %p212, %s18, 1
      %p214 = scmp.lt.s32.totalorder %s19, 3
      %s215 = scalar_select %p214, %s19, 3
      %s216 = smul.addr %s213, 4
      %s217 = sadd.s32 %s215, %s216
      %s218 = smul.addr %s217, 4
      %s219 = scalar_lea.vmem %s2, %s218
      %p220 = pneg %p105
      %p221 = pneg %p102
      %p222 = pneg %p133
      %p223 = pneg %p130
      %p224 = scmp.lt.s32.totalorder %s18, 1
      %s225 = scalar_select %p224, %s18, 1
      %p226 = scmp.lt.s32.totalorder %s19, 3
      %s227 = scalar_select %p226, %s19, 3
      %s228 = smul.addr %s225, 4
      %s229 = sadd.s32 %s227, %s228
      %s230 = smul.addr %s229, 4
      %s231 = scalar_lea.vmem %s3, %s230
      %p232 = scmp.lt.s32.totalorder %s18, 1
      %s233 = scalar_select %p232, %s18, 1
      %p234 = scmp.lt.s32.totalorder %s19, 3
      %s235 = scalar_select %p234, %s19, 3
      %s236 = smul.addr %s233, 4
      %s237 = sadd.s32 %s235, %s236
      %s238 = smul.addr %s237, 4
      %s239 = scalar_lea.vmem %s0, %s238
      %p240 = scmp.lt.s32.totalorder %s18, 1
      %s241 = scalar_select %p240, %s18, 1
      %p242 = scmp.lt.s32.totalorder %s19, 3
      %s243 = scalar_select %p242, %s19, 3
      %s244 = smul.addr %s241, 4
      %s245 = sadd.s32 %s243, %s244
      %s246 = smul.addr %s245, 4
      %s247 = scalar_lea.vmem %s1, %s246
      %p248 = scmp.lt.s32.totalorder %s18, 1
      %s249 = scalar_select %p248, %s18, 1
      %p250 = scmp.lt.s32.totalorder %s19, 3
      %s251 = scalar_select %p250, %s19, 3
      %s252 = smul.addr %s249, 4
      %s253 = sadd.s32 %s251, %s252
      %s254 = smul.addr %s253, 4
      %s255 = scalar_lea.vmem %s2, %s254
      %p256 = scmp.lt.s32.totalorder %s18, 1
      %s257 = scalar_select %p256, %s18, 1
      %p258 = scmp.lt.s32.totalorder %s19, 3
      %s259 = scalar_select %p258, %s19, 3
      %s260 = smul.addr %s257, 4
      %s261 = sadd.s32 %s259, %s260
      %s262 = smul.addr %s261, 4
      %s263 = scalar_lea.vmem %s3, %s262
      %v265 = vld [vmem:[%s239] sm:$0xf]
      %v266 = vld [vmem:[%s247] sm:$0xf]
      %v267 = vld [vmem:[%s255] sm:$0xf]
      %vm268 = vcmask 64512
      %v270 = vsel %vm268, %v265, 0
      %v273 = vsel %vm268, %v266, 0
      %275 = vmatprep.subr.bf16.mxu0 0
      %276 = vmatpush1.bf16.xpose.msra.mxu0 %v273
      %277 = vmatprep.subr.bf16.mxu0 0
      %278 = vmatpush1.bf16.xpose.msra.mxu0 0
      %279 = vmatprep.subr.bf16.mxu0 0
      %280 = vmatpush1.bf16.xpose.msra.mxu0 0
      %281 = vmatprep.subr.bf16.mxu0 0
      %282 = vmatpush1.bf16.xpose.msra.mxu0 0
      %283 = vmatprep.subr.bf16.mxu0 0
      %284 = vmatpush1.bf16.xpose.msra.mxu0 0
      %285 = vmatprep.subr.bf16.mxu0 0
      %286 = vmatpush1.bf16.xpose.msra.mxu0 0
      %287 = vmatprep.subr.bf16.mxu0 0
      %288 = vmatpush1.bf16.xpose.msra.mxu0 0
      %289 = vmatprep.subr.bf16.mxu0 0
      %290 = vmatpush1.bf16.xpose.msra.mxu0 0
      %291 = vmatprep.subr.bf16.mxu0 0
      %292 = vmatpush1.bf16.xpose.msra.mxu0 0
      %293 = vmatprep.subr.bf16.mxu0 0
      %294 = vmatpush1.bf16.xpose.msra.mxu0 0
      %295 = vmatprep.subr.bf16.mxu0 0
      %296 = vmatpush1.bf16.xpose.msra.mxu0 0
      %297 = vmatprep.subr.bf16.mxu0 0
      %298 = vmatpush1.bf16.xpose.msra.mxu0 0
      %299 = vmatprep.subr.bf16.mxu0 0
      %300 = vmatpush1.bf16.xpose.msra.mxu0 0
      %301 = vmatprep.subr.bf16.mxu0 0
      %302 = vmatpush1.bf16.xpose.msra.mxu0 0
      %303 = vmatprep.subr.bf16.mxu0 0
      %304 = vmatpush1.bf16.xpose.msra.mxu0 0
      %305 = vmatprep.subr.bf16.mxu0 0
      %306 = vmatpush1.bf16.xpose.msra.mxu0 0
      %307 = vmatprep.mubr.bf16.mxu0 0
      %308 = vmatmul.mubr.bf16.gmra.mrb[0].mxu0 %v270
      %v309 = vpop.f32.mrb[0].mxu0
      %v310 = vadd.f32 0.0, %v309
      %v311 = vpop.f32.mrb[0].mxu0
      %v312 = vpop.f32.mrb[0].mxu0
      %v313 = vpop.f32.mrb[0].mxu0
      %314 = vdwg.mxu0
      %v315 = vmul.f32 %v310, 0.35355338
      %v316 = vlaneseq
      %v317 = vshrl.u32 %v316, 7
      %v318 = vlaneseq
      %v319 = vand.u32 %v318, 127
      %vm320 = vcmp.le.s32.totalorder %v319, %v317
      %v321 = vsel %vm320, %v315, -1e+30
      %v322 = vsel %vm268, %v321, -inf
      %323 = vmax.xlane.f32.xlu0 %v322
      %v324 = vpop.xlane.xlu0 %323
      %v325 = vsub.f32 %v321, %v324
      %v326 = vmul.f32 %v325, 1.442695
      %v327 = vpow.pop %v326
      %v328 = vsel %vm268, %v327, 0.0
      %329 = vadd.xlane.f32.xlu0 %v328
      %v330 = vpop.xlane.xlu0 %329
      %v331 = vrcp.pop %v330
      %v332 = vmul.f32 %v327, %v331
      %v333 = vpack.c.bf16 %v332, %v332
      %v335 = vsel %vm268, %v333, 0
      %vm337 = vcmask 1043456
      %v339 = vsel %vm337, %v267, 0
      %341 = vmatprep.subr.bf16.mxu0 0
      %342 = vmatpush1.bf16.msra.mxu0 %v339
      %343 = vmatprep.subr.bf16.mxu0 0
      %344 = vmatpush1.bf16.msra.mxu0 0
      %345 = vmatprep.subr.bf16.mxu0 0
      %346 = vmatpush1.bf16.msra.mxu0 0
      %347 = vmatprep.subr.bf16.mxu0 0
      %348 = vmatpush1.bf16.msra.mxu0 0
      %349 = vmatprep.subr.bf16.mxu0 0
      %350 = vmatpush1.bf16.msra.mxu0 0
      %351 = vmatprep.subr.bf16.mxu0 0
      %352 = vmatpush1.bf16.msra.mxu0 0
      %353 = vmatprep.subr.bf16.mxu0 0
      %354 = vmatpush1.bf16.msra.mxu0 0
      %355 = vmatprep.subr.bf16.mxu0 0
      %356 = vmatpush1.bf16.msra.mxu0 0
      %357 = vmatprep.subr.bf16.mxu0 0
      %358 = vmatpush1.bf16.msra.mxu0 0
      %359 = vmatprep.subr.bf16.mxu0 0
      %360 = vmatpush1.bf16.msra.mxu0 0
      %361 = vmatprep.subr.bf16.mxu0 0
      %362 = vmatpush1.bf16.msra.mxu0 0
      %363 = vmatprep.subr.bf16.mxu0 0
      %364 = vmatpush1.bf16.msra.mxu0 0
      %365 = vmatprep.subr.bf16.mxu0 0
      %366 = vmatpush1.bf16.msra.mxu0 0
      %367 = vmatprep.subr.bf16.mxu0 0
      %368 = vmatpush1.bf16.msra.mxu0 0
      %369 = vmatprep.subr.bf16.mxu0 0
      %370 = vmatpush1.bf16.msra.mxu0 0
      %371 = vmatprep.subr.bf16.mxu0 0
      %372 = vmatpush1.bf16.msra.mxu0 0
      %373 = vmatprep.mubr.bf16.mxu0 0
      %374 = vmatmul.mubr.bf16.gmra.mrb[0].mxu0 %v335
      %v375 = vpop.f32.mrb[0].mxu0
      %v376 = vadd.f32 0.0, %v375
      %v377 = vpop.f32.mrb[0].mxu0
      %v378 = vpop.f32.mrb[0].mxu0
      %v379 = vpop.f32.mrb[0].mxu0
      %380 = vdwg.mxu0
      %v381 = vpack.c.bf16 %v376, %v376
      %vm382 = vcmask 60416
      %383 = vst.msk [vmem:[%s263] sm:$0xf] %vm382, %v381
      %p384 = scmp.lt.s32.totalorder %s18, 1
      %s385 = scalar_select %p384, %s18, 1
      %p386 = scmp.lt.s32.totalorder %s19, 3
      %s387 = scalar_select %p386, %s19, 3
      %s388 = smul.addr %s385, 4
      %s389 = sadd.s32 %s387, %s388
      %s390 = smul.addr %s389, 4
      %s391 = scalar_lea.vmem %s3, %s390
      // Predicated region
      $region33: #{transformer_lm_forward.8} parent=31 // pred_check
        %p392 = pneg %p130
      $region34: #{transformer_lm_forward.8} parent=31 // pred_check_branch
        %394 = sbr.rel (%p392) target = $region36
      $region35: #{transformer_lm_forward.8} parent=31 // pred_region
        _
      $region36: #{transformer_lm_forward.8} parent=31 // pred_fallthru
        _
    $region32: #{transformer_lm_forward.8} parent=5 // pred_fallthru
      _
    %p395 = scmp.le.s32.totalorder 2, %s9
    // Predicated region
    $region37: #{transformer_lm_forward.8} parent=5 // pred_check
      %p396 = pneg %p395
    $region38: #{transformer_lm_forward.8} parent=5 // pred_check_branch
      %398 = sbr.rel (%p396) target = $region40
    $region39: #{transformer_lm_forward.8} parent=5 // pred_region
      %s399 = ssub.s32 %s9, 2
      // Predicated region
      $region41: #{transformer_lm_forward.8} parent=39 // pred_check
        %p400 = pneg %p136
      $region42: #{transformer_lm_forward.8} parent=39 // pred_check_branch
        %402 = sbr.rel (%p400) target = $region44
      $region43: #{transformer_lm_forward.8} parent=39 // pred_region
        %p403 = scmp.lt.s32.totalorder %s20, 1
        %s404 = scalar_select %p403, %s20, 1
        %p405 = scmp.lt.s32.totalorder %s21, 3
        %s406 = scalar_select %p405, %s21, 3
        %s407 = smul.addr %s404, 4
        %s408 = sadd.s32 %s406, %s407
        %s409 = smul.addr %s408, 4
        %s410 = scalar_lea.vmem %s3, %s409
      $region44: #{transformer_lm_forward.8} parent=39 // pred_fallthru
        _
    $region40: #{transformer_lm_forward.8} parent=5 // pred_fallthru
      _
  $region6: #{transformer_lm_forward.8} parent=0 // loop_footer
    %s13 = sadd.s32 1, %s9
  $region7: #{transformer_lm_forward.8} parent=0 // loop_footer_branch
    %8 = sbr.rel target = $region3
  $region8: #{transformer_lm_forward.8} parent=0 // loop_exit
    _

// kernel: transformer_lm_forward.7
$region0: #{transformer_lm_forward.7}
  #allocation0 [shape = 'u32[]', space=smem, size = 0x4, offset = 0x4, fixed_abs, tag = 'smem constant byte address 0x4 - core index']
  #allocation1 [shape = 'u32[144,128]{1,0:T(1,128)}', space=vmem, size = 0x12000, scoped, tag = 'internal scratch']
  %s0 = inlined_call_operand.vmem [shape: f32[16,32], index: 0, kind: input, shape index: {}]
  %s1 = inlined_call_operand.vmem [shape: f32[1,32], index: 1, kind: input, shape index: {}]
  %s2 = inlined_call_operand.vmem [shape: f32[1,32], index: 2, kind: input, shape index: {}]
  %s3 = inlined_call_operand.vmem [shape: bf16[32,96], index: 3, kind: input, shape index: {}]
  %s4 = inlined_call_operand.vmem [shape: f32[1,96], index: 4, kind: input, shape index: {}]
  %s5 = inlined_call_operand.vmem [shape: bf16[16,96], index: 5, kind: output, shape index: {}]
  %s6 = sld [smem:[#allocation0]]
  $region30: #{transformer_lm_forward.7} parent=0
    _
  %s8 = ssub.s32 1, %s6
  %s9 = scalar_select 0, %s8, %s6
  // Predicated region
  $region2: #{transformer_lm_forward.7} parent=0 // pred_check
    _
  $region3: #{transformer_lm_forward.7} parent=0 // pred_check_branch
    %11 = sbr.rel (0) target = $region5
  $region4: #{transformer_lm_forward.7} parent=0 // pred_region
    _
  $region5: #{transformer_lm_forward.7} parent=0 // pred_fallthru
    _
  // Predicated region
  $region6: #{transformer_lm_forward.7} parent=0 // pred_check
    _
  $region7: #{transformer_lm_forward.7} parent=0 // pred_check_branch
    %13 = sbr.rel (0) target = $region9
  $region8: #{transformer_lm_forward.7} parent=0 // pred_region
    _
  $region9: #{transformer_lm_forward.7} parent=0 // pred_fallthru
    _
  // Predicated region
  $region10: #{transformer_lm_forward.7} parent=0 // pred_check
    _
  $region11: #{transformer_lm_forward.7} parent=0 // pred_check_branch
    %15 = sbr.rel (0) target = $region13
  $region12: #{transformer_lm_forward.7} parent=0 // pred_region
    _
  $region13: #{transformer_lm_forward.7} parent=0 // pred_fallthru
    _
  // Predicated region
  $region14: #{transformer_lm_forward.7} parent=0 // pred_check
    _
  $region15: #{transformer_lm_forward.7} parent=0 // pred_check_branch
    %17 = sbr.rel (0) target = $region17
  $region16: #{transformer_lm_forward.7} parent=0 // pred_region
    _
  $region17: #{transformer_lm_forward.7} parent=0 // pred_fallthru
    _
  // Predicated region
  $region18: #{transformer_lm_forward.7} parent=0 // pred_check
    _
  $region19: #{transformer_lm_forward.7} parent=0 // pred_check_branch
    %19 = sbr.rel (0) target = $region21
  $region20: #{transformer_lm_forward.7} parent=0 // pred_region
    _
  $region21: #{transformer_lm_forward.7} parent=0 // pred_fallthru
    _
  %v21 = vld [vmem:[%s0] sm:$0xff]
  %v22 = vld [vmem:[%s0 + $0x8] sm:$0xff]
  %v23 = vld [vmem:[%s1] sm:$0x1]
  %v24 = vld [vmem:[%s2] sm:$0x1]
  %vm25 = vcmask 261120
  %v26 = vsel %vm25, %v21, 0.0
  %27 = vadd.xlane.f32.xlu0 %v26
  %v28 = vpop.xlane.xlu0 %27
  %v29 = vsel %vm25, %v22, 0.0
  %30 = vadd.xlane.f32.xlu0 %v29
  %v31 = vpop.xlane.xlu0 %30
  %v32 = vrcp.pop 32.0
  %v33 = vmul.f32 %v28, %v32
  %v34 = vmul.f32 %v31, %v32
  %v35 = vsub.f32 %v21, %v33
  %v36 = vsub.f32 %v22, %v34
  %v37 = vmul.f32 %v35, %v35
  %v38 = vmul.f32 %v36, %v36
  %v39 = vsel %vm25, %v37, 0.0
  %40 = vadd.xlane.f32.xlu0 %v39
  %v41 = vpop.xlane.xlu0 %40
  %v42 = vsel %vm25, %v38, 0.0
  %43 = vadd.xlane.f32.xlu0 %v42
  %v44 = vpop.xlane.xlu0 %43
  %v45 = vmul.f32 %v41, %v32
  %v46 = vmul.f32 %v44, %v32
  %v47 = vadd.f32 %v45, 1e-05
  %v48 = vadd.f32 %v46, 1e-05
  %v49 = vrsqrt.pop %v47
  %v50 = vrsqrt.pop %v48
  %v51 = vmul.f32 %v35, %v49
  %v52 = vmul.f32 %v36, %v50
  %v54 = vlaneseq
  %v55 = vshrl.u32 %v54, 7
  %v56 = vsub.s32 0, %v55
  %v57 = vrot.slane %v23, %v56
  %v59 = vmul.f32 %v51, %v57
  %v60 = vmul.f32 %v52, %v57
  %v62 = vlaneseq
  %v63 = vshrl.u32 %v62, 7
  %v64 = vsub.s32 0, %v63
  %v65 = vrot.slane %v24, %v64
  %v67 = vadd.f32 %v59, %v65
  %v68 = vadd.f32 %v60, %v65
  %v69 = vpack.c.bf16 %v68, %v67
  %v70 = vld [vmem:[%s3] sm:$0xf]
  %v71 = vld [vmem:[%s3 + $0x4] sm:$0xf]
  %v72 = vld [vmem:[%s3 + $0x8] sm:$0xf]
  %v73 = vld [vmem:[%s3 + $0xc] sm:$0xf]
  %v74 = vld [vmem:[%s4] sm:$0x1]
  %v76 = vlaneseq
  %v77 = vshrl.u32 %v76, 7
  %v78 = vsub.s32 0, %v77
  %v79 = vrot.slane %v74, %v78
  %v85 = vunpack.c.l.b16 %v70
  %v86 = vunpack.c.l.b16 %v71
  %v87 = vunpack.c.l.b16 %v72
  %v88 = vunpack.c.l.b16 %v73
  %v89 = vpack.c.b16 %v86, %v85
  %v90 = vpack.c.b16 %v88, %v87
  %v94 = vsel %vm25, %v69, 0
  %96 = vmatprep.subr.bf16.mxu0 0
  %97 = vmatpush1.bf16.msra.mxu0 %v89
  %98 = vmatprep.subr.bf16.mxu0 0
  %99 = vmatpush1.bf16.msra.mxu0 %v90
  %100 = vmatprep.subr.bf16.mxu0 0
  %101 = vmatpush1.bf16.msra.mxu0 0
  %102 = vmatprep.subr.bf16.mxu0 0
  %103 = vmatpush1.bf16.msra.mxu0 0
  %104 = vmatprep.subr.bf16.mxu0 0
  %105 = vmatpush1.bf16.msra.mxu0 0
  %106 = vmatprep.subr.bf16.mxu0 0
  %107 = vmatpush1.bf16.msra.mxu0 0
  %108 = vmatprep.subr.bf16.mxu0 0
  %109 = vmatpush1.bf16.msra.mxu0 0
  %110 = vmatprep.subr.bf16.mxu0 0
  %111 = vmatpush1.bf16.msra.mxu0 0
  %112 = vmatprep.subr.bf16.mxu0 0
  %113 = vmatpush1.bf16.msra.mxu0 0
  %114 = vmatprep.subr.bf16.mxu0 0
  %115 = vmatpush1.bf16.msra.mxu0 0
  %116 = vmatprep.subr.bf16.mxu0 0
  %117 = vmatpush1.bf16.msra.mxu0 0
  %118 = vmatprep.subr.bf16.mxu0 0
  %119 = vmatpush1.bf16.msra.mxu0 0
  %120 = vmatprep.subr.bf16.mxu0 0
  %121 = vmatpush1.bf16.msra.mxu0 0
  %122 = vmatprep.subr.bf16.mxu0 0
  %123 = vmatpush1.bf16.msra.mxu0 0
  %124 = vmatprep.subr.bf16.mxu0 0
  %125 = vmatpush1.bf16.msra.mxu0 0
  %126 = vmatprep.subr.bf16.mxu0 0
  %127 = vmatpush1.bf16.msra.mxu0 0
  %128 = vmatprep.mubr.bf16.mxu0 0
  %129 = vmatmul.mubr.bf16.gmra.mrb[0].mxu0 %v94
  %v130 = vpop.f32.mrb[0].mxu0
  %v131 = vadd.f32 %v79, %v130
  %v132 = vpop.f32.mrb[0].mxu0
  %v133 = vpop.f32.mrb[0].mxu0
  %v134 = vadd.f32 %v79, %v133
  %v135 = vpop.f32.mrb[0].mxu0
  %136 = vdwg.mxu0
  %v137 = vpack.c.bf16 %v134, %v131
  %v139 = vunpack.c.l.b16 %v137
  %v140 = vunpack.c.h.b16 %v137
  %v141 = vpack.c.b16 %v139, %v139
  %v142 = vpack.c.b16 %v140, %v140
  %vm145 = vcmask 781312
  %146 = vst.msk [vmem:[%s5] sm:$0xf] %vm145, %v141
  %147 = vst.msk [vmem:[%s5 + $0x4] sm:$0xf] %vm145, %v142
  // Predicated region
  $region22: #{transformer_lm_forward.7} parent=0 // pred_check
    _
  $region23: #{transformer_lm_forward.7} parent=0 // pred_check_branch
    %149 = sbr.rel (0) target = $region25
  $region24: #{transformer_lm_forward.7} parent=0 // pred_region
    _
  $region25: #{transformer_lm_forward.7} parent=0 // pred_fallthru
    _
  // Predicated region
  $region26: #{transformer_lm_forward.7} parent=0 // pred_check
    _
  $region27: #{transformer_lm_forward.7} parent=0 // pred_check_branch
    %151 = sbr.rel (0) target = $region29
  $region28: #{transformer_lm_forward.7} parent=0 // pred_region
    _
  $region29: #{transformer_lm_forward.7} parent=0 // pred_fallthru
    _

// kernel: transformer_lm_forward.13
$region0: #{transformer_lm_forward.13}
  #allocation0 [shape = 'u32[]', space=smem, size = 0x4, offset = 0x4, fixed_abs, tag = 'smem constant byte address 0x4 - core index']
  #allocation1 [shape = 'u32[144,128]{1,0:T(1,128)}', space=vmem, size = 0x12000, scoped, tag = 'internal scratch']
  %s0 = inlined_call_operand.vmem [shape: f32[16,32], index: 0, kind: input, shape index: {}]
  %s1 = inlined_call_operand.vmem [shape: f32[1,32], index: 1, kind: input, shape index: {}]
  %s2 = inlined_call_operand.vmem [shape: f32[1,32], index: 2, kind: input, shape index: {}]
  %s3 = inlined_call_operand.vmem [shape: bf16[32,64], index: 3, kind: input, shape index: {}]
  %s4 = inlined_call_operand.vmem [shape: f32[1,64], index: 4, kind: input, shape index: {}]
  %s5 = inlined_call_operand.hbm [shape: f32[16,64], index: 5, kind: output, shape index: {}]
  %s6 = sld [smem:[#allocation0]]
  $region30: #{transformer_lm_forward.13} parent=0
    _
  %s8 = ssub.s32 1, %s6
  %s9 = scalar_select 0, %s8, %s6
  $region1: #{transformer_lm_forward.13} parent=0
    #allocation2 [shape = 'u8[8192]{0}', space=vmem, size = 0x2000, scoped, tag = 'output window, operand 0, single buffered']
    #allocation3 [shape = 's32[1]{0}', space=sflag, size = 0x4, scoped, tag = 'scoped memory for transformer_lm_forward.13']
    %10 = vsyncpa [#allocation3], 0
    // Predicated region
    $region2: #{transformer_lm_forward.13} parent=1 // pred_check
      _
    $region3: #{transformer_lm_forward.13} parent=1 // pred_check_branch
      %12 = sbr.rel (0) target = $region5
    $region4: #{transformer_lm_forward.13} parent=1 // pred_region
      _
    $region5: #{transformer_lm_forward.13} parent=1 // pred_fallthru
      _
    // Predicated region
    $region6: #{transformer_lm_forward.13} parent=1 // pred_check
      _
    $region7: #{transformer_lm_forward.13} parent=1 // pred_check_branch
      %14 = sbr.rel (0) target = $region9
    $region8: #{transformer_lm_forward.13} parent=1 // pred_region
      _
    $region9: #{transformer_lm_forward.13} parent=1 // pred_fallthru
      _
    // Predicated region
    $region10: #{transformer_lm_forward.13} parent=1 // pred_check
      _
    $region11: #{transformer_lm_forward.13} parent=1 // pred_check_branch
      %16 = sbr.rel (0) target = $region13
    $region12: #{transformer_lm_forward.13} parent=1 // pred_region
      _
    $region13: #{transformer_lm_forward.13} parent=1 // pred_fallthru
      _
    // Predicated region
    $region14: #{transformer_lm_forward.13} parent=1 // pred_check
      _
    $region15: #{transformer_lm_forward.13} parent=1 // pred_check_branch
      %18 = sbr.rel (0) target = $region17
    $region16: #{transformer_lm_forward.13} parent=1 // pred_region
      _
    $region17: #{transformer_lm_forward.13} parent=1 // pred_fallthru
      _
    // Predicated region
    $region18: #{transformer_lm_forward.13} parent=1 // pred_check
      _
    $region19: #{transformer_lm_forward.13} parent=1 // pred_check_branch
      %20 = sbr.rel (0) target = $region21
    $region20: #{transformer_lm_forward.13} parent=1 // pred_region
      _
    $region21: #{transformer_lm_forward.13} parent=1 // pred_fallthru
      _
    %v22 = vld [vmem:[%s0] sm:$0xff]
    %v23 = vld [vmem:[%s0 + $0x8] sm:$0xff]
    %v24 = vld [vmem:[%s1] sm:$0x1]
    %v25 = vld [vmem:[%s2] sm:$0x1]
    %vm26 = vcmask 261120
    %v27 = vsel %vm26, %v22, 0.0
    %28 = vadd.xlane.f32.xlu0 %v27
    %v29 = vpop.xlane.xlu0 %28
    %v30 = vsel %vm26, %v23, 0.0
    %31 = vadd.xlane.f32.xlu0 %v30
    %v32 = vpop.xlane.xlu0 %31
    %v33 = vrcp.pop 32.0
    %v34 = vmul.f32 %v29, %v33
    %v35 = vmul.f32 %v32, %v33
    %v36 = vsub.f32 %v22, %v34
    %v37 = vsub.f32 %v23, %v35
    %v38 = vmul.f32 %v36, %v36
    %v39 = vmul.f32 %v37, %v37
    %v40 = vsel %vm26, %v38, 0.0
    %41 = vadd.xlane.f32.xlu0 %v40
    %v42 = vpop.xlane.xlu0 %41
    %v43 = vsel %vm26, %v39, 0.0
    %44 = vadd.xlane.f32.xlu0 %v43
    %v45 = vpop.xlane.xlu0 %44
    %v46 = vmul.f32 %v42, %v33
    %v47 = vmul.f32 %v45, %v33
    %v48 = vadd.f32 %v46, 1e-05
    %v49 = vadd.f32 %v47, 1e-05
    %v50 = vrsqrt.pop %v48
    %v51 = vrsqrt.pop %v49
    %v52 = vmul.f32 %v36, %v50
    %v53 = vmul.f32 %v37, %v51
    %v55 = vlaneseq
    %v56 = vshrl.u32 %v55, 7
    %v57 = vsub.s32 0, %v56
    %v58 = vrot.slane %v24, %v57
    %v60 = vmul.f32 %v52, %v58
    %v61 = vmul.f32 %v53, %v58
    %v63 = vlaneseq
    %v64 = vshrl.u32 %v63, 7
    %v65 = vsub.s32 0, %v64
    %v66 = vrot.slane %v25, %v65
    %v68 = vadd.f32 %v60, %v66
    %v69 = vadd.f32 %v61, %v66
    %v70 = vpack.c.bf16 %v69, %v68
    %v71 = vld [vmem:[%s3] sm:$0xf]
    %v72 = vld [vmem:[%s3 + $0x4] sm:$0xf]
    %v73 = vld [vmem:[%s3 + $0x8] sm:$0xf]
    %v74 = vld [vmem:[%s3 + $0xc] sm:$0xf]
    %v75 = vld [vmem:[%s4] sm:$0x1]
    %v77 = vlaneseq
    %v78 = vshrl.u32 %v77, 7
    %v79 = vsub.s32 0, %v78
    %v80 = vrot.slane %v75, %v79
    %v86 = vunpack.c.l.b16 %v71
    %v87 = vunpack.c.l.b16 %v72
    %v88 = vunpack.c.l.b16 %v73
    %v89 = vunpack.c.l.b16 %v74
    %v90 = vpack.c.b16 %v87, %v86
    %v91 = vpack.c.b16 %v89, %v88
    %v95 = vsel %vm26, %v70, 0
    %97 = vmatprep.subr.bf16.mxu0 0
    %98 = vmatpush1.bf16.msra.mxu0 %v90
    %99 = vmatprep.subr.bf16.mxu0 0
    %100 = vmatpush1.bf16.msra.mxu0 %v91
    %101 = vmatprep.subr.bf16.mxu0 0
    %102 = vmatpush1.bf16.msra.mxu0 0
    %103 = vmatprep.subr.bf16.mxu0 0
    %104 = vmatpush1.bf16.msra.mxu0 0
    %105 = vmatprep.subr.bf16.mxu0 0
    %106 = vmatpush1.bf16.msra.mxu0 0
    %107 = vmatprep.subr.bf16.mxu0 0
    %108 = vmatpush1.bf16.msra.mxu0 0
    %109 = vmatprep.subr.bf16.mxu0 0
    %110 = vmatpush1.bf16.msra.mxu0 0
    %111 = vmatprep.subr.bf16.mxu0 0
    %112 = vmatpush1.bf16.msra.mxu0 0
    %113 = vmatprep.subr.bf16.mxu0 0
    %114 = vmatpush1.bf16.msra.mxu0 0
    %115 = vmatprep.subr.bf16.mxu0 0
    %116 = vmatpush1.bf16.msra.mxu0 0
    %117 = vmatprep.subr.bf16.mxu0 0
    %118 = vmatpush1.bf16.msra.mxu0 0
    %119 = vmatprep.subr.bf16.mxu0 0
    %120 = vmatpush1.bf16.msra.mxu0 0
    %121 = vmatprep.subr.bf16.mxu0 0
    %122 = vmatpush1.bf16.msra.mxu0 0
    %123 = vmatprep.subr.bf16.mxu0 0
    %124 = vmatpush1.bf16.msra.mxu0 0
    %125 = vmatprep.subr.bf16.mxu0 0
    %126 = vmatpush1.bf16.msra.mxu0 0
    %127 = vmatprep.subr.bf16.mxu0 0
    %128 = vmatpush1.bf16.msra.mxu0 0
    %129 = vmatprep.mubr.bf16.mxu0 0
    %130 = vmatmul.mubr.bf16.gmra.mrb[0].mxu0 %v95
    %v131 = vpop.f32.mrb[0].mxu0
    %v132 = vadd.f32 %v80, %v131
    %v133 = vpop.f32.mrb[0].mxu0
    %v134 = vpop.f32.mrb[0].mxu0
    %v135 = vadd.f32 %v80, %v134
    %v136 = vpop.f32.mrb[0].mxu0
    %137 = vdwg.mxu0
    %vm138 = vcmask 523264
    %139 = vst.msk [vmem:[#allocation2] sm:$0xff] %vm138, %v132
    %140 = vst.msk [vmem:[#allocation2 + $0x8] sm:$0xff] %vm138, %v135
    // Predicated region
    $region22: #{transformer_lm_forward.13} parent=1 // pred_check
      _
    $region23: #{transformer_lm_forward.13} parent=1 // pred_check_branch
      %142 = sbr.rel (0) target = $region25
    $region24: #{transformer_lm_forward.13} parent=1 // pred_region
      %s144 = ssub.s32 256, 256
      %145 = vsyncadd [#allocation3], %s144
      %s146 = sshll.u32 [#allocation2], 4
      %s147 = int_to_ptr.vmem [resolvable:$true] %s146
      %152 = dma.vmem_to_hbm [thread:$0]  %s147, 256, %s5, [#allocation3], 128, 128, 8
    $region25: #{transformer_lm_forward.13} parent=1 // pred_fallthru
      _
    // Predicated region
    $region26: #{transformer_lm_forward.13} parent=1 // pred_check
      _
    $region27: #{transformer_lm_forward.13} parent=1 // pred_check_branch
      %154 = sbr.rel (0) target = $region29
    $region28: #{transformer_lm_forward.13} parent=1 // pred_region
      %155 = dma.done [#allocation3], 256
    $region29: #{transformer_lm_forward.13} parent=1 // pred_fallthru
      _
    %156 = vsyncpa [#allocation3], 1

// kernel: transformer_lm_forward.9
$region0: #{transformer_lm_forward.9}
  #allocation0 [shape = 'u32[]', space=smem, size = 0x4, offset = 0x4, fixed_abs, tag = 'smem constant byte address 0x4 - core index']
  #allocation1 [shape = 'u32[144,128]{1,0:T(1,128)}', space=vmem, size = 0x12000, scoped, tag = 'internal scratch']
  %s0 = inlined_call_operand.vmem [shape: f32[16,32], index: 0, kind: input, shape index: {}, may-alias: {0,10}]
  %s1 = inlined_call_operand.vmem [shape: bf16[16,32], index: 1, kind: input, shape index: {}]
  %s2 = inlined_call_operand.vmem [shape: bf16[32,32], index: 2, kind: input, shape index: {}]
  %s3 = inlined_call_operand.vmem [shape: f32[1,32], index: 3, kind: input, shape index: {}]
  %s4 = inlined_call_operand.vmem [shape: f32[1,32], index: 4, kind: input, shape index: {}]
  %s5 = inlined_call_operand.vmem [shape: f32[1,32], index: 5, kind: input, shape index: {}]
  %s6 = inlined_call_operand.vmem [shape: bf16[32,64], index: 6, kind: input, shape index: {}]
  %s7 = inlined_call_operand.vmem [shape: f32[1,64], index: 7, kind: input, shape index: {}]
  %s8 = inlined_call_operand.vmem [shape: bf16[64,32], index: 8, kind: input, shape index: {}]
  %s9 = inlined_call_operand.vmem [shape: f32[1,32], index: 9, kind: input, shape index: {}]
  %s10 = inlined_call_operand.vmem [shape: f32[16,32], index: 10, kind: output, shape index: {}, may-alias: {0,10}]
  %s11 = sld [smem:[#allocation0]]
  $region50: #{transformer_lm_forward.9} parent=0
    _
  %s13 = ssub.s32 1, %s11
  %s14 = scalar_select 0, %s13, %s11
  // Predicated region
  $region2: #{transformer_lm_forward.9} parent=0 // pred_check
    _
  $region3: #{transformer_lm_forward.9} parent=0 // pred_check_branch
    %16 = sbr.rel (0) target = $region5
  $region4: #{transformer_lm_forward.9} parent=0 // pred_region
    _
  $region5: #{transformer_lm_forward.9} parent=0 // pred_fallthru
    _
  // Predicated region
  $region6: #{transformer_lm_forward.9} parent=0 // pred_check
    _
  $region7: #{transformer_lm_forward.9} parent=0 // pred_check_branch
    %18 = sbr.rel (0) target = $region9
  $region8: #{transformer_lm_forward.9} parent=0 // pred_region
    _
  $region9: #{transformer_lm_forward.9} parent=0 // pred_fallthru
    _
  // Predicated region
  $region10: #{transformer_lm_forward.9} parent=0 // pred_check
    _
  $region11: #{transformer_lm_forward.9} parent=0 // pred_check_branch
    %20 = sbr.rel (0) target = $region13
  $region12: #{transformer_lm_forward.9} parent=0 // pred_region
    _
  $region13: #{transformer_lm_forward.9} parent=0 // pred_fallthru
    _
  // Predicated region
  $region14: #{transformer_lm_forward.9} parent=0 // pred_check
    _
  $region15: #{transformer_lm_forward.9} parent=0 // pred_check_branch
    %22 = sbr.rel (0) target = $region17
  $region16: #{transformer_lm_forward.9} parent=0 // pred_region
    _
  $region17: #{transformer_lm_forward.9} parent=0 // pred_fallthru
    _
  // Predicated region
  $region18: #{transformer_lm_forward.9} parent=0 // pred_check
    _
  $region19: #{transformer_lm_forward.9} parent=0 // pred_check_branch
    %24 = sbr.rel (0) target = $region21
  $region20: #{transformer_lm_forward.9} parent=0 // pred_region
    _
  $region21: #{transformer_lm_forward.9} parent=0 // pred_fallthru
    _
  // Predicated region
  $region22: #{transformer_lm_forward.9} parent=0 // pred_check
    _
  $region23: #{transformer_lm_forward.9} parent=0 // pred_check_branch
    %26 = sbr.rel (0) target = $region25
  $region24: #{transformer_lm_forward.9} parent=0 // pred_region
    _
  $region25: #{transformer_lm_forward.9} parent=0 // pred_fallthru
    _
  // Predicated region
  $region26: #{transformer_lm_forward.9} parent=0 // pred_check
    _
  $region27: #{transformer_lm_forward.9} parent=0 // pred_check_branch
    %28 = sbr.rel (0) target = $region29
  $region28: #{transformer_lm_forward.9} parent=0 // pred_region
    _
  $region29: #{transformer_lm_forward.9} parent=0 // pred_fallthru
    _
  // Predicated region
  $region30: #{transformer_lm_forward.9} parent=0 // pred_check
    _
  $region31: #{transformer_lm_forward.9} parent=0 // pred_check_branch
    %30 = sbr.rel (0) target = $region33
  $region32: #{transformer_lm_forward.9} parent=0 // pred_region
    _
  $region33: #{transformer_lm_forward.9} parent=0 // pred_fallthru
    _
  // Predicated region
  $region34: #{transformer_lm_forward.9} parent=0 // pred_check
    _
  $region35: #{transformer_lm_forward.9} parent=0 // pred_check_branch
    %32 = sbr.rel (0) target = $region37
  $region36: #{transformer_lm_forward.9} parent=0 // pred_region
    _
  $region37: #{transformer_lm_forward.9} parent=0 // pred_fallthru
    _
  // Predicated region
  $region38: #{transformer_lm_forward.9} parent=0 // pred_check
    _
  $region39: #{transformer_lm_forward.9} parent=0 // pred_check_branch
    %34 = sbr.rel (0) target = $region41
  $region40: #{transformer_lm_forward.9} parent=0 // pred_region
    _
  $region41: #{transformer_lm_forward.9} parent=0 // pred_fallthru
    _
  %v36 = vld [vmem:[%s0] sm:$0xff]
  %v37 = vld [vmem:[%s0 + $0x8] sm:$0xff]
  %v38 = vld [vmem:[%s1] sm:$0xf]
  %v39 = vld [vmem:[%s1 + $0x4] sm:$0xf]
  %v40 = vld [vmem:[%s2] sm:$0xf]
  %v41 = vld [vmem:[%s2 + $0x4] sm:$0xf]
  %v42 = vld [vmem:[%s2 + $0x8] sm:$0xf]
  %v43 = vld [vmem:[%s2 + $0xc] sm:$0xf]
  %v46 = vunpack.c.l.b16 %v38
  %v47 = vunpack.c.l.b16 %v39
  %v48 = vpack.c.b16 %v47, %v46
  %v53 = vunpack.c.l.b16 %v40
  %v54 = vunpack.c.l.b16 %v41
  %v55 = vunpack.c.l.b16 %v42
  %v56 = vunpack.c.l.b16 %v43
  %v57 = vpack.c.b16 %v54, %v53
  %v58 = vpack.c.b16 %v56, %v55
  %vm61 = vcmask 261120
  %v63 = vsel %vm61, %v48, 0
  %65 = vmatprep.subr.bf16.mxu0 0
  %66 = vmatpush1.bf16.msra.mxu0 %v57
  %67 = vmatprep.subr.bf16.mxu0 0
  %68 = vmatpush1.bf16.msra.mxu0 %v58
  %69 = vmatprep.subr.bf16.mxu0 0
  %70 = vmatpush1.bf16.msra.mxu0 0
  %71 = vmatprep.subr.bf16.mxu0 0
  %72 = vmatpush1.bf16.msra.mxu0 0
  %73 = vmatprep.subr.bf16.mxu0 0
  %74 = vmatpush1.bf16.msra.mxu0 0
  %75 = vmatprep.subr.bf16.mxu0 0
  %76 = vmatpush1.bf16.msra.mxu0 0
  %77 = vmatprep.subr.bf16.mxu0 0
  %78 = vmatpush1.bf16.msra.mxu0 0
  %79 = vmatprep.subr.bf16.mxu0 0
  %80 = vmatpush1.bf16.msra.mxu0 0
  %81 = vmatprep.subr.bf16.mxu0 0
  %82 = vmatpush1.bf16.msra.mxu0 0
  %83 = vmatprep.subr.bf16.mxu0 0
  %84 = vmatpush1.bf16.msra.mxu0 0
  %85 = vmatprep.subr.bf16.mxu0 0
  %86 = vmatpush1.bf16.msra.mxu0 0
  %87 = vmatprep.subr.bf16.mxu0 0
  %88 = vmatpush1.bf16.msra.mxu0 0
  %89 = vmatprep.subr.bf16.mxu0 0
  %90 = vmatpush1.bf16.msra.mxu0 0
  %91 = vmatprep.subr.bf16.mxu0 0
  %92 = vmatpush1.bf16.msra.mxu0 0
  %93 = vmatprep.subr.bf16.mxu0 0
  %94 = vmatpush1.bf16.msra.mxu0 0
  %95 = vmatprep.subr.bf16.mxu0 0
  %96 = vmatpush1.bf16.msra.mxu0 0
  %97 = vmatprep.mubr.bf16.mxu0 0
  %98 = vmatmul.mubr.bf16.gmra.mrb[0].mxu0 %v63
  %v99 = vpop.f32.mrb[0].mxu0
  %v100 = vadd.f32 0.0, %v99
  %v101 = vpop.f32.mrb[0].mxu0
  %v102 = vpop.f32.mrb[0].mxu0
  %v103 = vadd.f32 0.0, %v102
  %v104 = vpop.f32.mrb[0].mxu0
  %105 = vdwg.mxu0
  %v106 = vadd.f32 %v36, %v100
  %v107 = vadd.f32 %v37, %v103
  %v108 = vld [vmem:[%s3] sm:$0x1]
  %v110 = vlaneseq
  %v111 = vshrl.u32 %v110, 7
  %v112 = vsub.s32 0, %v111
  %v113 = vrot.slane %v108, %v112
  %v115 = vadd.f32 %v106, %v113
  %v116 = vadd.f32 %v107, %v113
  %v117 = vld [vmem:[%s4] sm:$0x1]
  %v118 = vld [vmem:[%s5] sm:$0x1]
  %v119 = vsel %vm61, %v115, 0.0
  %120 = vadd.xlane.f32.xlu0 %v119
  %v121 = vpop.xlane.xlu0 %120
  %v122 = vsel %vm61, %v116, 0.0
  %123 = vadd.xlane.f32.xlu0 %v122
  %v124 = vpop.xlane.xlu0 %123
  %v125 = vrcp.pop 32.0
  %v126 = vmul.f32 %v121, %v125
  %v127 = vmul.f32 %v124, %v125
  %v128 = vsub.f32 %v115, %v126
  %v129 = vsub.f32 %v116, %v127
  %v130 = vmul.f32 %v128, %v128
  %v131 = vmul.f32 %v129, %v129
  %v132 = vsel %vm61, %v130, 0.0
  %133 = vadd.xlane.f32.xlu0 %v132
  %v134 = vpop.xlane.xlu0 %133
  %v135 = vsel %vm61, %v131, 0.0
  %136 = vadd.xlane.f32.xlu0 %v135
  %v137 = vpop.xlane.xlu0 %136
  %v138 = vmul.f32 %v134, %v125
  %v139 = vmul.f32 %v137, %v125
  %v140 = vadd.f32 %v138, 1e-05
  %v141 = vadd.f32 %v139, 1e-05
  %v142 = vrsqrt.pop %v140
  %v143 = vrsqrt.pop %v141
  %v144 = vmul.f32 %v128, %v142
  %v145 = vmul.f32 %v129, %v143
  %v147 = vlaneseq
  %v148 = vshrl.u32 %v147, 7
  %v149 = vsub.s32 0, %v148
  %v150 = vrot.slane %v117, %v149
  %v152 = vmul.f32 %v144, %v150
  %v153 = vmul.f32 %v145, %v150
  %v155 = vlaneseq
  %v156 = vshrl.u32 %v155, 7
  %v157 = vsub.s32 0, %v156
  %v158 = vrot.slane %v118, %v157
  %v160 = vadd.f32 %v152, %v158
  %v161 = vadd.f32 %v153, %v158
  %v162 = vpack.c.bf16 %v161, %v160
  %v163 = vld [vmem:[%s6] sm:$0xf]
  %v164 = vld [vmem:[%s6 + $0x4] sm:$0xf]
  %v165 = vld [vmem:[%s6 + $0x8] sm:$0xf]
  %v166 = vld [vmem:[%s6 + $0xc] sm:$0xf]
  %v167 = vld [vmem:[%s7] sm:$0x1]
  %v169 = vlaneseq
  %v170 = vshrl.u32 %v169, 7
  %v171 = vsub.s32 0, %v170
  %v172 = vrot.slane %v167, %v171
  %v178 = vunpack.c.l.b16 %v163
  %v179 = vunpack.c.l.b16 %v164
  %v180 = vunpack.c.l.b16 %v165
  %v181 = vunpack.c.l.b16 %v166
  %v182 = vpack.c.b16 %v179, %v178
  %v183 = vpack.c.b16 %v181, %v180
  %v187 = vsel %vm61, %v162, 0
  %189 = vmatprep.subr.bf16.mxu0 0
  %190 = vmatpush1.bf16.msra.mxu0 %v182
  %191 = vmatprep.subr.bf16.mxu0 0
  %192 = vmatpush1.bf16.msra.mxu0 %v183
  %193 = vmatprep.subr.bf16.mxu0 0
  %194 = vmatpush1.bf16.msra.mxu0 0
  %195 = vmatprep.subr.bf16.mxu0 0
  %196 = vmatpush1.bf16.msra.mxu0 0
  %197 = vmatprep.subr.bf16.mxu0 0
  %198 = vmatpush1.bf16.msra.mxu0 0
  %199 = vmatprep.subr.bf16.mxu0 0
  %200 = vmatpush1.bf16.msra.mxu0 0
  %201 = vmatprep.subr.bf16.mxu0 0
  %202 = vmatpush1.bf16.msra.mxu0 0
  %203 = vmatprep.subr.bf16.mxu0 0
  %204 = vmatpush1.bf16.msra.mxu0 0
  %205 = vmatprep.subr.bf16.mxu0 0
  %206 = vmatpush1.bf16.msra.mxu0 0
  %207 = vmatprep.subr.bf16.mxu0 0
  %208 = vmatpush1.bf16.msra.mxu0 0
  %209 = vmatprep.subr.bf16.mxu0 0
  %210 = vmatpush1.bf16.msra.mxu0 0
  %211 = vmatprep.subr.bf16.mxu0 0
  %212 = vmatpush1.bf16.msra.mxu0 0
  %213 = vmatprep.subr.bf16.mxu0 0
  %214 = vmatpush1.bf16.msra.mxu0 0
  %215 = vmatprep.subr.bf16.mxu0 0
  %216 = vmatpush1.bf16.msra.mxu0 0
  %217 = vmatprep.subr.bf16.mxu0 0
  %218 = vmatpush1.bf16.msra.mxu0 0
  %219 = vmatprep.subr.bf16.mxu0 0
  %220 = vmatpush1.bf16.msra.mxu0 0
  %221 = vmatprep.mubr.bf16.mxu0 0
  %222 = vmatmul.mubr.bf16.gmra.mrb[0].mxu0 %v187
  %v223 = vpop.f32.mrb[0].mxu0
  %v224 = vadd.f32 %v172, %v223
  %v225 = vpop.f32.mrb[0].mxu0
  %v226 = vpop.f32.mrb[0].mxu0
  %v227 = vadd.f32 %v172, %v226
  %v228 = vpop.f32.mrb[0].mxu0
  %229 = vdwg.mxu0
  %v230 = vmul.f32 %v224, 0.5
  %v231 = vmul.f32 %v227, 0.5
  %v232 = vmul.f32 %v224, 0.70710677
  %v233 = vmul.f32 %v227, 0.70710677
  %v234 = verf.f32.pop %v232
  %v235 = verf.f32.pop %v233
  %v236 = vadd.f32 %v234, 1.0
  %v237 = vadd.f32 %v235, 1.0
  %v238 = vmul.f32 %v230, %v236
  %v239 = vmul.f32 %v231, %v237
  %v240 = vpack.c.bf16 %v239, %v238
  %v241 = vld [vmem:[%s8] sm:$0xf]
  %v242 = vld [vmem:[%s8 + $0x4] sm:$0xf]
  %v243 = vld [vmem:[%s8 + $0x8] sm:$0xf]
  %v244 = vld [vmem:[%s8 + $0xc] sm:$0xf]
  %v245 = vld [vmem:[%s8 + $0x10] sm:$0xf]
  %v246 = vld [vmem:[%s8 + $0x14] sm:$0xf]
  %v247 = vld [vmem:[%s8 + $0x18] sm:$0xf]
  %v248 = vld [vmem:[%s8 + $0x1c] sm:$0xf]
  %v249 = vld [vmem:[%s9] sm:$0x1]
  %v251 = vlaneseq
  %v252 = vshrl.u32 %v251, 7
  %v253 = vsub.s32 0, %v252
  %v254 = vrot.slane %v249, %v253
  %v264 = vunpack.c.l.b16 %v241
  %v265 = vunpack.c.l.b16 %v242
  %v266 = vunpack.c.l.b16 %v243
  %v267 = vunpack.c.l.b16 %v244
  %v268 = vunpack.c.l.b16 %v245
  %v269 = vunpack.c.l.b16 %v246
  %v270 = vunpack.c.l.b16 %v247
  %v271 = vunpack.c.l.b16 %v248
  %v272 = vpack.c.b16 %v265, %v264
  %v273 = vpack.c.b16 %v267, %v266
  %v274 = vpack.c.b16 %v269, %v268
  %v275 = vpack.c.b16 %v271, %v270
  %vm280 = vcmask 523264
  %v282 = vsel %vm280, %v240, 0
  %284 = vmatprep.subr.bf16.mxu0 0
  %285 = vmatpush1.bf16.msra.mxu0 %v272
  %286 = vmatprep.subr.bf16.mxu0 0
  %287 = vmatpush1.bf16.msra.mxu0 %v273
  %288 = vmatprep.subr.bf16.mxu0 0
  %289 = vmatpush1.bf16.msra.mxu0 %v274
  %290 = vmatprep.subr.bf16.mxu0 0
  %291 = vmatpush1.bf16.msra.mxu0 %v275
  %292 = vmatprep.subr.bf16.mxu0 0
  %293 = vmatpush1.bf16.msra.mxu0 0
  %294 = vmatprep.subr.bf16.mxu0 0
  %295 = vmatpush1.bf16.msra.mxu0 0
  %296 = vmatprep.subr.bf16.mxu0 0
  %297 = vmatpush1.bf16.msra.mxu0 0
  %298 = vmatprep.subr.bf16.mxu0 0
  %299 = vmatpush1.bf16.msra.mxu0 0
  %300 = vmatprep.subr.bf16.mxu0 0
  %301 = vmatpush1.bf16.msra.mxu0 0
  %302 = vmatprep.subr.bf16.mxu0 0
  %303 = vmatpush1.bf16.msra.mxu0 0
  %304 = vmatprep.subr.bf16.mxu0 0
  %305 = vmatpush1.bf16.msra.mxu0 0
  %306 = vmatprep.subr.bf16.mxu0 0
  %307 = vmatpush1.bf16.msra.mxu0 0
  %308 = vmatprep.subr.bf16.mxu0 0
  %309 = vmatpush1.bf16.msra.mxu0 0
  %310 = vmatprep.subr.bf16.mxu0 0
  %311 = vmatpush1.bf16.msra.mxu0 0
  %312 = vmatprep.subr.bf16.mxu0 0
  %313 = vmatpush1.bf16.msra.mxu0 0
  %314 = vmatprep.subr.bf16.mxu0 0
  %315 = vmatpush1.bf16.msra.mxu0 0
  %316 = vmatprep.mubr.bf16.mxu0 0
  %317 = vmatmul.mubr.bf16.gmra.mrb[0].mxu0 %v282
  %v318 = vpop.f32.mrb[0].mxu0
  %v319 = vadd.f32 %v254, %v318
  %v320 = vpop.f32.mrb[0].mxu0
  %v321 = vpop.f32.mrb[0].mxu0
  %v322 = vadd.f32 %v254, %v321
  %v323 = vpop.f32.mrb[0].mxu0
  %324 = vdwg.mxu0
  %v325 = vadd.f32 %v115, %v319
  %v326 = vadd.f32 %v116, %v322
  %327 = vst.msk [vmem:[%s10] sm:$0xff] %vm61, %v325
  %328 = vst.msk [vmem:[%s10 + $0x8] sm:$0xff] %vm61, %v326
  // Predicated region
  $region42: #{transformer_lm_forward.9} parent=0 // pred_check
    _
  $region43: #{transformer_lm_forward.9} parent=0 // pred_check_branch
    %330 = sbr.rel (0) target = $region45
  $region44: #{transformer_lm_forward.9} parent=0 // pred_region
    _
  $region45: #{transformer_lm_forward.9} parent=0 // pred_fallthru
    _
  // Predicated region
  $region46: #{transformer_lm_forward.9} parent=0 // pred_check
    _
  $region47: #{transformer_lm_forward.9} parent=0 // pred_check_branch
    %332 = sbr.rel (0) target = $region49
  $region48: #{transformer_lm_forward.9} parent=0 // pred_region
    _
  $region49: #{transformer_lm_forward.9} parent=0 // pred_fallthru
    _

</llo_original>
